<compile_context>
chip_gen: v5e
topology: v5e:2x2
jax: 0.10.0
libtpu: 0.0.40
codegen_flags: <defaults>
</compile_context>

<pallas_src>
import functools
import numpy as np
import jax
import jax.numpy as jnp
from jax.experimental import pallas as pl
from jax.experimental.pallas import tpu as pltpu

EPS = 1e-5  # nn.LayerNorm default eps


# ---------------------------------------------------------------------------
# In-kernel helpers
# ---------------------------------------------------------------------------
def _layernorm(x, gamma, beta):
    mu = jnp.mean(x, axis=-1, keepdims=True)
    xc = x - mu
    var = jnp.mean(xc * xc, axis=-1, keepdims=True)
    return xc * jax.lax.rsqrt(var + EPS) * gamma + beta


# ---------------------------------------------------------------------------
# Pallas kernel 1: norm1 + windowed multi-head self-attention (+combined bias/mask) + proj
# WIN_TILE windows (each N tokens, C channels) per grid step.
# ---------------------------------------------------------------------------
def _window_attn_kernel(x_ref, g1_ref, b1_ref, wqkv_ref, bqkv_ref,
                        wproj_ref, bproj_ref, bias_ref, o_ref, *, num_heads):
    wt, N, C = x_ref.shape
    hd = C // num_heads

    x = x_ref[...].reshape(wt * N, C)                 # leading-dim merge: layout no-op
    xn = _layernorm(x, g1_ref[0], b1_ref[0])          # norm1 (per-token, order-safe)

    qkv = jnp.dot(xn, wqkv_ref[...],
                  preferred_element_type=jnp.float32) + bqkv_ref[0]     # (wt*N, 3C)
    q = qkv[:, :C].reshape(wt, N, C)                  # qk scale pre-folded into Wq/bq
    k = qkv[:, C:2 * C].reshape(wt, N, C)
    v = qkv[:, 2 * C:].reshape(wt, N, C)

    bias = bias_ref[...]                              # (bw, nh, N, N), bw in {1, wt}

    heads = []
    for h in range(num_heads):                        # static head loop, window-batched matmuls
        sl = slice(h * hd, (h + 1) * hd)
        attn = jnp.einsum('wqd,wkd->wqk', q[:, :, sl], k[:, :, sl],
                          preferred_element_type=jnp.float32)           # (wt, N, N)
        attn = attn + bias[:, h]                      # rel-pos bias (+ shift mask), broadcasts
        attn = attn - jnp.max(attn, axis=-1, keepdims=True)
        e = jnp.exp(attn)
        probs = e / jnp.sum(e, axis=-1, keepdims=True)
        heads.append(jnp.einsum('wqk,wkd->wqd', probs, v[:, :, sl],
                                preferred_element_type=jnp.float32))    # (wt, N, hd)

    cat = jnp.concatenate(heads, axis=-1).reshape(wt * N, C)            # torch head-concat order
    y = jnp.dot(cat, wproj_ref[...], preferred_element_type=jnp.float32) + bproj_ref[0]
    o_ref[...] = y.reshape(wt, N, C).astype(o_ref.dtype)


def _pick_win_tile(B_, N, nW, target_rows=512):
    """Windows per grid step: divides B_, compatible with nW cycling, ~target rows, >=2 steps."""
    cands = [wt for wt in range(1, B_ + 1)
             if B_ % wt == 0 and (wt % nW == 0 or nW % wt == 0) and wt * N <= target_rows]
    if not cands:
        return 1
    multi = [wt for wt in cands if B_ // wt >= 2]
    return max(multi or cands)


def window_attention(xw, p, num_heads, nW, shift):
    B_, N, C = xw.shape
    wt = _pick_win_tile(B_, N, nW)
    bias = p['attn_bias']                             # (1, nh, N, N) or (nW, nh, N, N)

    if shift > 0:
        if wt % nW == 0:
            if wt != nW:
                bias = jnp.tile(bias, (wt // nW, 1, 1, 1))
            bw = wt
            bias_map = lambda t: (0, 0, 0, 0)         # resident across the whole grid
        else:
            assert nW % wt == 0
            period = nW // wt
            bw = wt
            bias_map = lambda t: (t % period, 0, 0, 0)
    else:
        bw = 1                                         # no mask DMA / add for shift==0 blocks
        bias_map = lambda t: (0, 0, 0, 0)

    kernel = functools.partial(_window_attn_kernel, num_heads=num_heads)
    return pl.pallas_call(
        kernel,
        out_shape=jax.ShapeDtypeStruct((B_, N, C), xw.dtype),
        grid=(B_ // wt,),
        in_specs=[
            pl.BlockSpec((wt, N, C), lambda t: (t, 0, 0)),
            pl.BlockSpec((1, C), lambda t: (0, 0)),
            pl.BlockSpec((1, C), lambda t: (0, 0)),
            pl.BlockSpec((C, 3 * C), lambda t: (0, 0)),
            pl.BlockSpec((1, 3 * C), lambda t: (0, 0)),
            pl.BlockSpec((C, C), lambda t: (0, 0)),
            pl.BlockSpec((1, C), lambda t: (0, 0)),
            pl.BlockSpec((bw, num_heads, N, N), bias_map),
        ],
        out_specs=pl.BlockSpec((wt, N, C), lambda t: (t, 0, 0)),
        compiler_params=pltpu.CompilerParams(dimension_semantics=("parallel",)),
    )(xw, p['gamma1'], p['beta1'], p['wqkv'], p['bqkv'], p['wproj'], p['bproj'], bias)


# ---------------------------------------------------------------------------
# Pallas kernel 2: both residuals + Mlp(norm2(.)), tiled over tokens.
#   out = x + fc2(gelu(fc1(norm2(x))))   with   x = shortcut + attn_out
# ---------------------------------------------------------------------------
def _mlp_kernel(s_ref, a_ref, g2_ref, bt2_ref, w1_ref, b1_ref, w2_ref, b2_ref, o_ref):
    x = s_ref[...] + a_ref[...]                       # residual 1 fused in-kernel
    xn = _layernorm(x, g2_ref[0], bt2_ref[0])
    h = jnp.dot(xn, w1_ref[...], preferred_element_type=jnp.float32) + b1_ref[0]
    h = 0.5 * h * (1.0 + jax.lax.erf(h * (1.0 / np.sqrt(2.0))))   # exact GELU (nn.GELU)
    y = jnp.dot(h, w2_ref[...], preferred_element_type=jnp.float32) + b2_ref[0]
    o_ref[...] = (x + y).astype(o_ref.dtype)          # residual 2 fused


def _pick_token_tile(T, target=256):
    cands = [d for d in range(8, min(T, target) + 1, 8) if T % d == 0]
    if not cands:
        return T
    multi = [d for d in cands if T // d >= 2]
    return max(multi or cands)


def mlp_block(shortcut2d, attn2d, p):
    T, C = shortcut2d.shape
    Hd = p['w1'].shape[1]
    TM = _pick_token_tile(T)
    return pl.pallas_call(
        _mlp_kernel,
        out_shape=jax.ShapeDtypeStruct((T, C), shortcut2d.dtype),
        grid=(T // TM,),
        in_specs=[
            pl.BlockSpec((TM, C), lambda i: (i, 0)),
            pl.BlockSpec((TM, C), lambda i: (i, 0)),
            pl.BlockSpec((1, C), lambda i: (0, 0)),
            pl.BlockSpec((1, C), lambda i: (0, 0)),
            pl.BlockSpec((C, Hd), lambda i: (0, 0)),   # weights resident across the grid
            pl.BlockSpec((1, Hd), lambda i: (0, 0)),
            pl.BlockSpec((Hd, C), lambda i: (0, 0)),
            pl.BlockSpec((1, C), lambda i: (0, 0)),
        ],
        out_specs=pl.BlockSpec((TM, C), lambda i: (i, 0)),
        compiler_params=pltpu.CompilerParams(dimension_semantics=("parallel",)),
    )(shortcut2d, attn2d, p['gamma2'], p['beta2'], p['w1'], p['b1'], p['w2'], p['b2'])


# ---------------------------------------------------------------------------
# Plain-JAX glue (reshapes / rolls / window partition) + parameter setup
# ---------------------------------------------------------------------------
def window_partition(x, ws):
    B, H, W, C = x.shape
    x = x.reshape(B, H // ws, ws, W // ws, ws, C)
    return x.transpose(0, 1, 3, 2, 4, 5).reshape(-1, ws, ws, C)


def window_reverse(windows, ws, H, W):
    B = windows.shape[0] // (H * W // ws // ws)
    x = windows.reshape(B, H // ws, W // ws, ws, ws, -1)
    return x.transpose(0, 1, 3, 2, 4, 5).reshape(B, H, W, -1)


def relative_position_index(ws):
    coords = np.stack(np.meshgrid(np.arange(ws), np.arange(ws), indexing='ij'))
    coords_flatten = coords.reshape(2, -1)
    rel = coords_flatten[:, :, None] - coords_flatten[:, None, :]
    rel = rel.transpose(1, 2, 0).copy()
    rel[:, :, 0] += ws - 1
    rel[:, :, 1] += ws - 1
    rel[:, :, 0] *= 2 * ws - 1
    return rel.sum(-1)                                # (N, N)


def compute_attn_mask(H, W, ws, shift):
    img_mask = np.zeros((1, H, W, 1), np.float32)
    h_slices = (slice(0, -ws), slice(-ws, -shift), slice(-shift, None))
    w_slices = (slice(0, -ws), slice(-ws, -shift), slice(-shift, None))
    cnt = 0
    for h in h_slices:
        for w in w_slices:
            img_mask[:, h, w, :] = cnt
            cnt += 1
    mw = img_mask.reshape(1, H // ws, ws, W // ws, ws, 1)
    mw = mw.transpose(0, 1, 3, 2, 4, 5).reshape(-1, ws * ws)
    attn_mask = mw[:, None, :] - mw[:, :, None]
    return np.where(attn_mask != 0, -100.0, 0.0).astype(np.float32)   # (nW, N, N)


def init_block_params(key, dim, num_heads, ws, mlp_ratio, H, W, shift):
    keys = jax.random.split(key, 6)
    N = ws * ws
    hidden = int(dim * mlp_ratio)
    scale = (dim // num_heads) ** (-0.5)
    p = {}
    p['gamma1'] = jnp.ones((1, dim), jnp.float32)
    p['beta1'] = jnp.zeros((1, dim), jnp.float32)
    # weights stored as (in, out) so the kernel does x @ W (synthetic deterministic init)
    wqkv = 0.02 * jax.random.normal(keys[0], (dim, 3 * dim), jnp.float32)
    bqkv = 0.02 * jax.random.normal(keys[1], (1, 3 * dim), jnp.float32)
    # fold qk scale into the Q columns: (x@Wq + bq) * s == x@(Wq*s) + bq*s  (exact rewrite)
    p['wqkv'] = wqkv.at[:, :dim].multiply(scale)
    p['bqkv'] = bqkv.at[:, :dim].multiply(scale)
    p['wproj'] = 0.02 * jax.random.normal(keys[2], (dim, dim), jnp.float32)
    p['bproj'] = jnp.zeros((1, dim), jnp.float32)
    table = 0.02 * jax.random.normal(keys[3], ((2 * ws - 1) * (2 * ws - 1), num_heads), jnp.float32)
    rpi = relative_position_index(ws).reshape(-1)
    rel_bias = table[rpi].reshape(N, N, num_heads).transpose(2, 0, 1)   # (nh, N, N)
    if shift > 0:
        mask = jnp.asarray(compute_attn_mask(H, W, ws, shift))          # (nW, N, N)
        p['attn_bias'] = rel_bias[None] + mask[:, None]                 # (nW, nh, N, N)
    else:
        p['attn_bias'] = rel_bias[None]                                 # (1, nh, N, N)
    p['gamma2'] = jnp.ones((1, dim), jnp.float32)
    p['beta2'] = jnp.zeros((1, dim), jnp.float32)
    p['w1'] = 0.02 * jax.random.normal(keys[4], (dim, hidden), jnp.float32)
    p['b1'] = jnp.zeros((1, hidden), jnp.float32)
    p['w2'] = 0.02 * jax.random.normal(keys[5], (hidden, dim), jnp.float32)
    p['b2'] = jnp.zeros((1, dim), jnp.float32)
    return p


def swin_block_forward(x, p, H, W, ws, shift, num_heads):
    B, L, C = x.shape
    nW = (H // ws) * (W // ws)
    shortcut = x
    xs = x.reshape(B, H, W, C)
    if shift > 0:
        xs = jnp.roll(xs, shift=(-shift, -shift), axis=(1, 2))
    xw = window_partition(xs, ws).reshape(-1, ws * ws, C)
    attn_w = window_attention(xw, p, num_heads, nW, shift)       # Pallas kernel
    attn_w = attn_w.reshape(-1, ws, ws, C)
    xs = window_reverse(attn_w, ws, H, W)
    if shift > 0:
        xs = jnp.roll(xs, shift=(shift, shift), axis=(1, 2))
    attn_out = xs.reshape(B * L, C)
    # residual 1 + norm2 + MLP + residual 2 all fused in the second Pallas kernel
    out = mlp_block(shortcut.reshape(B * L, C), attn_out, p)
    return out.reshape(B, L, C)


def basic_layer_forward(x, blocks, H, W, num_heads):
    # TODO(synk): `downsample` is None for this layer (the default); PatchMerging not instantiated.
    for p, ws, shift in blocks:
        x = swin_block_forward(x, p, H, W, ws, shift, num_heads)
    return x


# ---------------------------------------------------------------------------
if __name__ == "__main__":
    B, H, W, dim = 2, 8, 8, 32
    depth, num_heads, window_size, mlp_ratio = 2, 4, 4, 4.0

    key = jax.random.PRNGKey(0)
    kx, kp = jax.random.split(key)
    x = jax.random.normal(kx, (B, H * W, dim), jnp.float32)

    block_keys = jax.random.split(kp, depth)
    blocks = []
    for i in range(depth):
        shift = 0 if i % 2 == 0 else window_size // 2
        ws = window_size
        if min(H, W) <= ws:                 # mirror SwinTransformerBlock.__init__ adjustment
            shift, ws = 0, min(H, W)
        blocks.append((init_block_params(block_keys[i], dim, num_heads, ws,
                                         mlp_ratio, H, W, shift), ws, shift))

    out = basic_layer_forward(x, blocks, H, W, num_heads)
    jax.block_until_ready(out)
    assert out.shape == (B, H * W, dim)
    assert bool(jnp.all(jnp.isfinite(out)))
    print("KERNEL_OK")
</pallas_src>

<mosaic_0001>
module attributes {stable_mosaic.version = 11 : i64} {
  func.func @_window_attn_kernel(%arg0: i32, %arg1: memref<4x16x32xf32, #tpu.memory_space<vmem>>, %arg2: memref<1x32xf32, #tpu.memory_space<vmem>>, %arg3: memref<1x32xf32, #tpu.memory_space<vmem>>, %arg4: memref<32x96xf32, #tpu.memory_space<vmem>>, %arg5: memref<1x96xf32, #tpu.memory_space<vmem>>, %arg6: memref<32x32xf32, #tpu.memory_space<vmem>>, %arg7: memref<1x32xf32, #tpu.memory_space<vmem>>, %arg8: memref<1x4x16x16xf32, #tpu.memory_space<vmem>>, %arg9: memref<4x16x32xf32, #tpu.memory_space<vmem>>) attributes {dimension_semantics = [#tpu.dimension_semantics<parallel>], iteration_bounds = array<i64: 2>, scalar_prefetch = 0 : i64, scratch_operands = 0 : i64, tpu.core_type = #tpu.core_type<tc>, window_params = [{transform_indices = @transform_0, window_bounds = array<i64: 4, 16, 32>}, {pipeline_mode = #tpu.pipeline_mode<synchronous>, transform_indices = @transform_1, window_bounds = array<i64: 1, 32>}, {pipeline_mode = #tpu.pipeline_mode<synchronous>, transform_indices = @transform_2, window_bounds = array<i64: 1, 32>}, {pipeline_mode = #tpu.pipeline_mode<synchronous>, transform_indices = @transform_3, window_bounds = array<i64: 32, 96>}, {pipeline_mode = #tpu.pipeline_mode<synchronous>, transform_indices = @transform_4, window_bounds = array<i64: 1, 96>}, {pipeline_mode = #tpu.pipeline_mode<synchronous>, transform_indices = @transform_5, window_bounds = array<i64: 32, 32>}, {pipeline_mode = #tpu.pipeline_mode<synchronous>, transform_indices = @transform_6, window_bounds = array<i64: 1, 32>}, {pipeline_mode = #tpu.pipeline_mode<synchronous>, transform_indices = @transform_7, window_bounds = array<i64: 1, 4, 16, 16>}, {transform_indices = @transform_8, window_bounds = array<i64: 4, 16, 32>}]} {
    %c0 = arith.constant 0 : index
    %c0_0 = arith.constant 0 : index
    %c0_1 = arith.constant 0 : index
    %0 = vector.load %arg1[%c0, %c0_0, %c0_1] : memref<4x16x32xf32, #tpu.memory_space<vmem>>, vector<4x16x32xf32>
    %1 = vector.shape_cast %0 : vector<4x16x32xf32> to vector<64x32xf32>
    %c0_2 = arith.constant 0 : index
    %c0_3 = arith.constant 0 : index
    %2 = vector.load %arg2[%c0_2, %c0_3] : memref<1x32xf32, #tpu.memory_space<vmem>>, vector<1x32xf32>
    %3 = vector.shape_cast %2 : vector<1x32xf32> to vector<32xf32>
    %c0_4 = arith.constant 0 : index
    %c0_5 = arith.constant 0 : index
    %4 = vector.load %arg3[%c0_4, %c0_5] : memref<1x32xf32, #tpu.memory_space<vmem>>, vector<1x32xf32>
    %5 = vector.shape_cast %4 : vector<1x32xf32> to vector<32xf32>
    %cst = arith.constant dense<0.000000e+00> : vector<64xf32>
    %6 = vector.multi_reduction <add>, %1, %cst [1] : vector<64x32xf32> to vector<64xf32>
    %7 = vector.shape_cast %6 : vector<64xf32> to vector<64x1xf32>
    %cst_6 = arith.constant 3.200000e+01 : f32
    %8 = vector.broadcast %cst_6 : f32 to vector<64x1xf32>
    %9 = arith.divf %7, %8 : vector<64x1xf32>
    %10 = vector.broadcast %9 : vector<64x1xf32> to vector<64x32xf32>
    %11 = arith.subf %1, %10 : vector<64x32xf32>
    %12 = arith.mulf %11, %11 : vector<64x32xf32>
    %cst_7 = arith.constant dense<0.000000e+00> : vector<64xf32>
    %13 = vector.multi_reduction <add>, %12, %cst_7 [1] : vector<64x32xf32> to vector<64xf32>
    %14 = vector.shape_cast %13 : vector<64xf32> to vector<64x1xf32>
    %cst_8 = arith.constant 3.200000e+01 : f32
    %15 = vector.broadcast %cst_8 : f32 to vector<64x1xf32>
    %16 = arith.divf %14, %15 : vector<64x1xf32>
    %cst_9 = arith.constant 9.99999974E-6 : f32
    %17 = vector.broadcast %cst_9 : f32 to vector<64x1xf32>
    %18 = arith.addf %16, %17 : vector<64x1xf32>
    %19 = math.rsqrt %18 : vector<64x1xf32>
    %20 = vector.broadcast %19 : vector<64x1xf32> to vector<64x32xf32>
    %21 = arith.mulf %11, %20 : vector<64x32xf32>
    %22 = vector.shape_cast %3 : vector<32xf32> to vector<1x32xf32>
    %23 = vector.broadcast %22 : vector<1x32xf32> to vector<64x32xf32>
    %24 = arith.mulf %21, %23 : vector<64x32xf32>
    %25 = vector.shape_cast %5 : vector<32xf32> to vector<1x32xf32>
    %26 = vector.broadcast %25 : vector<1x32xf32> to vector<64x32xf32>
    %27 = arith.addf %24, %26 : vector<64x32xf32>
    %c0_10 = arith.constant 0 : index
    %c0_11 = arith.constant 0 : index
    %28 = vector.load %arg4[%c0_10, %c0_11] : memref<32x96xf32, #tpu.memory_space<vmem>>, vector<32x96xf32>
    %cst_12 = arith.constant dense<0.000000e+00> : vector<64x96xf32>
    %29 = tpu.matmul %27, %28, %cst_12 {dimension_numbers = #tpu.dot_dimension_numbers<[1], [0], [0], [1], [0, 0, 1, 1], [], []>} : vector<64x32xf32>, vector<32x96xf32>, vector<64x96xf32> -> vector<64x96xf32>
    %c0_13 = arith.constant 0 : index
    %c0_14 = arith.constant 0 : index
    %30 = vector.load %arg5[%c0_13, %c0_14] : memref<1x96xf32, #tpu.memory_space<vmem>>, vector<1x96xf32>
    %31 = vector.shape_cast %30 : vector<1x96xf32> to vector<96xf32>
    %32 = vector.shape_cast %31 : vector<96xf32> to vector<1x96xf32>
    %33 = vector.broadcast %32 : vector<1x96xf32> to vector<64x96xf32>
    %34 = arith.addf %29, %33 : vector<64x96xf32>
    %35 = vector.extract_strided_slice %34 {offsets = [0, 0], sizes = [64, 32], strides = [1, 1]} : vector<64x96xf32> to vector<64x32xf32>
    %36 = vector.shape_cast %35 : vector<64x32xf32> to vector<4x16x32xf32>
    %37 = vector.extract_strided_slice %34 {offsets = [0, 32], sizes = [64, 32], strides = [1, 1]} : vector<64x96xf32> to vector<64x32xf32>
    %38 = vector.shape_cast %37 : vector<64x32xf32> to vector<4x16x32xf32>
    %39 = vector.extract_strided_slice %34 {offsets = [0, 64], sizes = [64, 32], strides = [1, 1]} : vector<64x96xf32> to vector<64x32xf32>
    %40 = vector.shape_cast %39 : vector<64x32xf32> to vector<4x16x32xf32>
    %c0_15 = arith.constant 0 : index
    %c0_16 = arith.constant 0 : index
    %c0_17 = arith.constant 0 : index
    %c0_18 = arith.constant 0 : index
    %41 = vector.load %arg8[%c0_15, %c0_16, %c0_17, %c0_18] : memref<1x4x16x16xf32, #tpu.memory_space<vmem>>, vector<1x4x16x16xf32>
    %42 = vector.extract_strided_slice %36 {offsets = [0, 0, 0], sizes = [4, 16, 8], strides = [1, 1, 1]} : vector<4x16x32xf32> to vector<4x16x8xf32>
    %43 = vector.extract_strided_slice %38 {offsets = [0, 0, 0], sizes = [4, 16, 8], strides = [1, 1, 1]} : vector<4x16x32xf32> to vector<4x16x8xf32>
    "tpu.trace_start"() <{level = 10 : i32, message = "wqd,wkd->wqk"}> : () -> ()
    %cst_19 = arith.constant dense<0.000000e+00> : vector<4x16x16xf32>
    %44 = tpu.matmul %42, %43, %cst_19 {dimension_numbers = #tpu.dot_dimension_numbers<[2], [2], [1], [1], [0, 0, 0, 1, 1, 1], [0], [0]>} : vector<4x16x8xf32>, vector<4x16x8xf32>, vector<4x16x16xf32> -> vector<4x16x16xf32>
    "tpu.trace_stop"() : () -> ()
    %45 = vector.extract_strided_slice %41 {offsets = [0, 0, 0, 0], sizes = [1, 1, 16, 16], strides = [1, 1, 1, 1]} : vector<1x4x16x16xf32> to vector<1x1x16x16xf32>
    %46 = vector.shape_cast %45 : vector<1x1x16x16xf32> to vector<1x16x16xf32>
    %47 = vector.broadcast %46 : vector<1x16x16xf32> to vector<4x16x16xf32>
    %48 = arith.addf %44, %47 : vector<4x16x16xf32>
    %cst_20 = arith.constant dense<0xFF800000> : vector<4x16xf32>
    %49 = vector.multi_reduction <maximumf>, %48, %cst_20 [2] : vector<4x16x16xf32> to vector<4x16xf32>
    %50 = vector.shape_cast %49 : vector<4x16xf32> to vector<4x16x1xf32>
    %51 = vector.broadcast %50 : vector<4x16x1xf32> to vector<4x16x16xf32>
    %52 = arith.subf %48, %51 : vector<4x16x16xf32>
    %53 = math.exp %52 : vector<4x16x16xf32>
    %cst_21 = arith.constant dense<0.000000e+00> : vector<4x16xf32>
    %54 = vector.multi_reduction <add>, %53, %cst_21 [2] : vector<4x16x16xf32> to vector<4x16xf32>
    %55 = vector.shape_cast %54 : vector<4x16xf32> to vector<4x16x1xf32>
    %56 = vector.broadcast %55 : vector<4x16x1xf32> to vector<4x16x16xf32>
    %57 = arith.divf %53, %56 : vector<4x16x16xf32>
    %58 = vector.extract_strided_slice %40 {offsets = [0, 0, 0], sizes = [4, 16, 8], strides = [1, 1, 1]} : vector<4x16x32xf32> to vector<4x16x8xf32>
    "tpu.trace_start"() <{level = 10 : i32, message = "wqk,wkd->wqd"}> : () -> ()
    %cst_22 = arith.constant dense<0.000000e+00> : vector<4x16x8xf32>
    %59 = tpu.matmul %57, %58, %cst_22 {dimension_numbers = #tpu.dot_dimension_numbers<[2], [1], [1], [2], [0, 0, 0, 1, 1, 2], [0], [0]>} : vector<4x16x16xf32>, vector<4x16x8xf32>, vector<4x16x8xf32> -> vector<4x16x8xf32>
    "tpu.trace_stop"() : () -> ()
    %60 = vector.extract_strided_slice %36 {offsets = [0, 0, 8], sizes = [4, 16, 8], strides = [1, 1, 1]} : vector<4x16x32xf32> to vector<4x16x8xf32>
    %61 = vector.extract_strided_slice %38 {offsets = [0, 0, 8], sizes = [4, 16, 8], strides = [1, 1, 1]} : vector<4x16x32xf32> to vector<4x16x8xf32>
    "tpu.trace_start"() <{level = 10 : i32, message = "wqd,wkd->wqk"}> : () -> ()
    %cst_23 = arith.constant dense<0.000000e+00> : vector<4x16x16xf32>
    %62 = tpu.matmul %60, %61, %cst_23 {dimension_numbers = #tpu.dot_dimension_numbers<[2], [2], [1], [1], [0, 0, 0, 1, 1, 1], [0], [0]>} : vector<4x16x8xf32>, vector<4x16x8xf32>, vector<4x16x16xf32> -> vector<4x16x16xf32>
    "tpu.trace_stop"() : () -> ()
    %63 = vector.extract_strided_slice %41 {offsets = [0, 1, 0, 0], sizes = [1, 1, 16, 16], strides = [1, 1, 1, 1]} : vector<1x4x16x16xf32> to vector<1x1x16x16xf32>
    %64 = vector.shape_cast %63 : vector<1x1x16x16xf32> to vector<1x16x16xf32>
    %65 = vector.broadcast %64 : vector<1x16x16xf32> to vector<4x16x16xf32>
    %66 = arith.addf %62, %65 : vector<4x16x16xf32>
    %cst_24 = arith.constant dense<0xFF800000> : vector<4x16xf32>
    %67 = vector.multi_reduction <maximumf>, %66, %cst_24 [2] : vector<4x16x16xf32> to vector<4x16xf32>
    %68 = vector.shape_cast %67 : vector<4x16xf32> to vector<4x16x1xf32>
    %69 = vector.broadcast %68 : vector<4x16x1xf32> to vector<4x16x16xf32>
    %70 = arith.subf %66, %69 : vector<4x16x16xf32>
    %71 = math.exp %70 : vector<4x16x16xf32>
    %cst_25 = arith.constant dense<0.000000e+00> : vector<4x16xf32>
    %72 = vector.multi_reduction <add>, %71, %cst_25 [2] : vector<4x16x16xf32> to vector<4x16xf32>
    %73 = vector.shape_cast %72 : vector<4x16xf32> to vector<4x16x1xf32>
    %74 = vector.broadcast %73 : vector<4x16x1xf32> to vector<4x16x16xf32>
    %75 = arith.divf %71, %74 : vector<4x16x16xf32>
    %76 = vector.extract_strided_slice %40 {offsets = [0, 0, 8], sizes = [4, 16, 8], strides = [1, 1, 1]} : vector<4x16x32xf32> to vector<4x16x8xf32>
    "tpu.trace_start"() <{level = 10 : i32, message = "wqk,wkd->wqd"}> : () -> ()
    %cst_26 = arith.constant dense<0.000000e+00> : vector<4x16x8xf32>
    %77 = tpu.matmul %75, %76, %cst_26 {dimension_numbers = #tpu.dot_dimension_numbers<[2], [1], [1], [2], [0, 0, 0, 1, 1, 2], [0], [0]>} : vector<4x16x16xf32>, vector<4x16x8xf32>, vector<4x16x8xf32> -> vector<4x16x8xf32>
    "tpu.trace_stop"() : () -> ()
    %78 = vector.extract_strided_slice %36 {offsets = [0, 0, 16], sizes = [4, 16, 8], strides = [1, 1, 1]} : vector<4x16x32xf32> to vector<4x16x8xf32>
    %79 = vector.extract_strided_slice %38 {offsets = [0, 0, 16], sizes = [4, 16, 8], strides = [1, 1, 1]} : vector<4x16x32xf32> to vector<4x16x8xf32>
    "tpu.trace_start"() <{level = 10 : i32, message = "wqd,wkd->wqk"}> : () -> ()
    %cst_27 = arith.constant dense<0.000000e+00> : vector<4x16x16xf32>
    %80 = tpu.matmul %78, %79, %cst_27 {dimension_numbers = #tpu.dot_dimension_numbers<[2], [2], [1], [1], [0, 0, 0, 1, 1, 1], [0], [0]>} : vector<4x16x8xf32>, vector<4x16x8xf32>, vector<4x16x16xf32> -> vector<4x16x16xf32>
    "tpu.trace_stop"() : () -> ()
    %81 = vector.extract_strided_slice %41 {offsets = [0, 2, 0, 0], sizes = [1, 1, 16, 16], strides = [1, 1, 1, 1]} : vector<1x4x16x16xf32> to vector<1x1x16x16xf32>
    %82 = vector.shape_cast %81 : vector<1x1x16x16xf32> to vector<1x16x16xf32>
    %83 = vector.broadcast %82 : vector<1x16x16xf32> to vector<4x16x16xf32>
    %84 = arith.addf %80, %83 : vector<4x16x16xf32>
    %cst_28 = arith.constant dense<0xFF800000> : vector<4x16xf32>
    %85 = vector.multi_reduction <maximumf>, %84, %cst_28 [2] : vector<4x16x16xf32> to vector<4x16xf32>
    %86 = vector.shape_cast %85 : vector<4x16xf32> to vector<4x16x1xf32>
    %87 = vector.broadcast %86 : vector<4x16x1xf32> to vector<4x16x16xf32>
    %88 = arith.subf %84, %87 : vector<4x16x16xf32>
    %89 = math.exp %88 : vector<4x16x16xf32>
    %cst_29 = arith.constant dense<0.000000e+00> : vector<4x16xf32>
    %90 = vector.multi_reduction <add>, %89, %cst_29 [2] : vector<4x16x16xf32> to vector<4x16xf32>
    %91 = vector.shape_cast %90 : vector<4x16xf32> to vector<4x16x1xf32>
    %92 = vector.broadcast %91 : vector<4x16x1xf32> to vector<4x16x16xf32>
    %93 = arith.divf %89, %92 : vector<4x16x16xf32>
    %94 = vector.extract_strided_slice %40 {offsets = [0, 0, 16], sizes = [4, 16, 8], strides = [1, 1, 1]} : vector<4x16x32xf32> to vector<4x16x8xf32>
    "tpu.trace_start"() <{level = 10 : i32, message = "wqk,wkd->wqd"}> : () -> ()
    %cst_30 = arith.constant dense<0.000000e+00> : vector<4x16x8xf32>
    %95 = tpu.matmul %93, %94, %cst_30 {dimension_numbers = #tpu.dot_dimension_numbers<[2], [1], [1], [2], [0, 0, 0, 1, 1, 2], [0], [0]>} : vector<4x16x16xf32>, vector<4x16x8xf32>, vector<4x16x8xf32> -> vector<4x16x8xf32>
    "tpu.trace_stop"() : () -> ()
    %96 = vector.extract_strided_slice %36 {offsets = [0, 0, 24], sizes = [4, 16, 8], strides = [1, 1, 1]} : vector<4x16x32xf32> to vector<4x16x8xf32>
    %97 = vector.extract_strided_slice %38 {offsets = [0, 0, 24], sizes = [4, 16, 8], strides = [1, 1, 1]} : vector<4x16x32xf32> to vector<4x16x8xf32>
    "tpu.trace_start"() <{level = 10 : i32, message = "wqd,wkd->wqk"}> : () -> ()
    %cst_31 = arith.constant dense<0.000000e+00> : vector<4x16x16xf32>
    %98 = tpu.matmul %96, %97, %cst_31 {dimension_numbers = #tpu.dot_dimension_numbers<[2], [2], [1], [1], [0, 0, 0, 1, 1, 1], [0], [0]>} : vector<4x16x8xf32>, vector<4x16x8xf32>, vector<4x16x16xf32> -> vector<4x16x16xf32>
    "tpu.trace_stop"() : () -> ()
    %99 = vector.extract_strided_slice %41 {offsets = [0, 3, 0, 0], sizes = [1, 1, 16, 16], strides = [1, 1, 1, 1]} : vector<1x4x16x16xf32> to vector<1x1x16x16xf32>
    %100 = vector.shape_cast %99 : vector<1x1x16x16xf32> to vector<1x16x16xf32>
    %101 = vector.broadcast %100 : vector<1x16x16xf32> to vector<4x16x16xf32>
    %102 = arith.addf %98, %101 : vector<4x16x16xf32>
    %cst_32 = arith.constant dense<0xFF800000> : vector<4x16xf32>
    %103 = vector.multi_reduction <maximumf>, %102, %cst_32 [2] : vector<4x16x16xf32> to vector<4x16xf32>
    %104 = vector.shape_cast %103 : vector<4x16xf32> to vector<4x16x1xf32>
    %105 = vector.broadcast %104 : vector<4x16x1xf32> to vector<4x16x16xf32>
    %106 = arith.subf %102, %105 : vector<4x16x16xf32>
    %107 = math.exp %106 : vector<4x16x16xf32>
    %cst_33 = arith.constant dense<0.000000e+00> : vector<4x16xf32>
    %108 = vector.multi_reduction <add>, %107, %cst_33 [2] : vector<4x16x16xf32> to vector<4x16xf32>
    %109 = vector.shape_cast %108 : vector<4x16xf32> to vector<4x16x1xf32>
    %110 = vector.broadcast %109 : vector<4x16x1xf32> to vector<4x16x16xf32>
    %111 = arith.divf %107, %110 : vector<4x16x16xf32>
    %112 = vector.extract_strided_slice %40 {offsets = [0, 0, 24], sizes = [4, 16, 8], strides = [1, 1, 1]} : vector<4x16x32xf32> to vector<4x16x8xf32>
    "tpu.trace_start"() <{level = 10 : i32, message = "wqk,wkd->wqd"}> : () -> ()
    %cst_34 = arith.constant dense<0.000000e+00> : vector<4x16x8xf32>
    %113 = tpu.matmul %111, %112, %cst_34 {dimension_numbers = #tpu.dot_dimension_numbers<[2], [1], [1], [2], [0, 0, 0, 1, 1, 2], [0], [0]>} : vector<4x16x16xf32>, vector<4x16x8xf32>, vector<4x16x8xf32> -> vector<4x16x8xf32>
    "tpu.trace_stop"() : () -> ()
    %114 = tpu.concatenate %59, %77, %95, %113 in 2 : vector<4x16x8xf32>, vector<4x16x8xf32>, vector<4x16x8xf32>, vector<4x16x8xf32> -> vector<4x16x32xf32>
    %115 = vector.shape_cast %114 : vector<4x16x32xf32> to vector<64x32xf32>
    %c0_35 = arith.constant 0 : index
    %c0_36 = arith.constant 0 : index
    %116 = vector.load %arg6[%c0_35, %c0_36] : memref<32x32xf32, #tpu.memory_space<vmem>>, vector<32x32xf32>
    %cst_37 = arith.constant dense<0.000000e+00> : vector<64x32xf32>
    %117 = tpu.matmul %115, %116, %cst_37 {dimension_numbers = #tpu.dot_dimension_numbers<[1], [0], [0], [1], [0, 0, 1, 1], [], []>} : vector<64x32xf32>, vector<32x32xf32>, vector<64x32xf32> -> vector<64x32xf32>
    %c0_38 = arith.constant 0 : index
    %c0_39 = arith.constant 0 : index
    %118 = vector.load %arg7[%c0_38, %c0_39] : memref<1x32xf32, #tpu.memory_space<vmem>>, vector<1x32xf32>
    %119 = vector.shape_cast %118 : vector<1x32xf32> to vector<32xf32>
    %120 = vector.shape_cast %119 : vector<32xf32> to vector<1x32xf32>
    %121 = vector.broadcast %120 : vector<1x32xf32> to vector<64x32xf32>
    %122 = arith.addf %117, %121 : vector<64x32xf32>
    %123 = vector.shape_cast %122 : vector<64x32xf32> to vector<4x16x32xf32>
    %c0_40 = arith.constant 0 : index
    %c0_41 = arith.constant 0 : index
    %c0_42 = arith.constant 0 : index
    %124 = vector.load %arg9[%c0_40, %c0_41, %c0_42] : memref<4x16x32xf32, #tpu.memory_space<vmem>>, vector<4x16x32xf32>
    tpu.vector_store %arg9[%c0_40, %c0_41, %c0_42], %123 {strides = array<i32>} : memref<4x16x32xf32, #tpu.memory_space<vmem>>, vector<4x16x32xf32>,
    return
  }
  func.func @transform_0(%arg0: i32) -> (i32, i32, i32) {
    %c0_i32 = arith.constant 0 : i32
    %c0_i32_0 = arith.constant 0 : i32
    %c0_i32_1 = arith.constant 0 : i32
    return %arg0, %c0_i32, %c0_i32_0 : i32, i32, i32
  }
  func.func @transform_1(%arg0: i32) -> (i32, i32) {
    %c0_i32 = arith.constant 0 : i32
    %c0_i32_0 = arith.constant 0 : i32
    %c0_i32_1 = arith.constant 0 : i32
    return %c0_i32, %c0_i32_0 : i32, i32
  }
  func.func @transform_2(%arg0: i32) -> (i32, i32) {
    %c0_i32 = arith.constant 0 : i32
    %c0_i32_0 = arith.constant 0 : i32
    %c0_i32_1 = arith.constant 0 : i32
    return %c0_i32, %c0_i32_0 : i32, i32
  }
  func.func @transform_3(%arg0: i32) -> (i32, i32) {
    %c0_i32 = arith.constant 0 : i32
    %c0_i32_0 = arith.constant 0 : i32
    %c0_i32_1 = arith.constant 0 : i32
    return %c0_i32, %c0_i32_0 : i32, i32
  }
  func.func @transform_4(%arg0: i32) -> (i32, i32) {
    %c0_i32 = arith.constant 0 : i32
    %c0_i32_0 = arith.constant 0 : i32
    %c0_i32_1 = arith.constant 0 : i32
    return %c0_i32, %c0_i32_0 : i32, i32
  }
  func.func @transform_5(%arg0: i32) -> (i32, i32) {
    %c0_i32 = arith.constant 0 : i32
    %c0_i32_0 = arith.constant 0 : i32
    %c0_i32_1 = arith.constant 0 : i32
    return %c0_i32, %c0_i32_0 : i32, i32
  }
  func.func @transform_6(%arg0: i32) -> (i32, i32) {
    %c0_i32 = arith.constant 0 : i32
    %c0_i32_0 = arith.constant 0 : i32
    %c0_i32_1 = arith.constant 0 : i32
    return %c0_i32, %c0_i32_0 : i32, i32
  }
  func.func @transform_7(%arg0: i32) -> (i32, i32, i32, i32) {
    %c0_i32 = arith.constant 0 : i32
    %c0_i32_0 = arith.constant 0 : i32
    %c0_i32_1 = arith.constant 0 : i32
    %c0_i32_2 = arith.constant 0 : i32
    %c0_i32_3 = arith.constant 0 : i32
    return %c0_i32, %c0_i32_0, %c0_i32_1, %c0_i32_2 : i32, i32, i32, i32
  }
  func.func @transform_8(%arg0: i32) -> (i32, i32, i32) {
    %c0_i32 = arith.constant 0 : i32
    %c0_i32_0 = arith.constant 0 : i32
    %c0_i32_1 = arith.constant 0 : i32
    return %arg0, %c0_i32, %c0_i32_0 : i32, i32, i32
  }
}

</mosaic_0001>

<llo_original>
// kernel: tpu_custom_call.1
$region0: #{tpu_custom_call.1}
  #allocation0 [shape = 'u32[]', space=smem, size = 0x4, offset = 0x4, fixed_abs, tag = 'smem constant byte address 0x4 - core index']
  #allocation1 [shape = 'u32[72,128]{1,0:T(1,128)}', space=vmem, size = 0x9000, scoped, tag = 'internal scratch']
  %s0 = inlined_call_operand.hbm [shape: f32[8,16,32], index: 0, kind: input, shape index: {}]
  %s1 = inlined_call_operand.hbm [shape: f32[1,32], index: 1, kind: input, shape index: {}]
  %s2 = inlined_call_operand.vmem [shape: f32[1,32], index: 2, kind: input, shape index: {}]
  %s3 = inlined_call_operand.hbm [shape: f32[32,96], index: 3, kind: input, shape index: {}]
  %s4 = inlined_call_operand.vmem [shape: f32[1,96], index: 4, kind: input, shape index: {}]
  %s5 = inlined_call_operand.hbm [shape: f32[32,32], index: 5, kind: input, shape index: {}]
  %s6 = inlined_call_operand.vmem [shape: f32[1,32], index: 6, kind: input, shape index: {}]
  %s7 = inlined_call_operand.hbm [shape: f32[1,4,16,16], index: 7, kind: input, shape index: {}]
  %s8 = inlined_call_operand.hbm [shape: f32[8,16,32], index: 8, kind: output, shape index: {}]
  %s9 = sld [smem:[#allocation0]]
  $region85: #{tpu_custom_call.1} parent=0
    _
  %s11 = ssub.s32 1, %s9
  %s12 = scalar_select 0, %s11, %s9
  $region1: #{tpu_custom_call.1} parent=0
    #allocation2 [shape = 'u8[65536]{0}', space=vmem, size = 0x10000, scoped, tag = 'input window, operand 0']
    #allocation3 [shape = 's32[2]{0}', space=sflag, size = 0x8, scoped, tag = 'scoped memory for tpu_custom_call.1']
    #allocation4 [shape = 's32[2]{0}', space=sflag, size = 0x8, scoped, tag = 'scoped memory for tpu_custom_call.1']
    #allocation5 [shape = 'u8[512]{0}', space=vmem, size = 0x400, scoped, tag = 'input window, operand 1, single buffered']
    #allocation6 [shape = 's32[1]{0}', space=sflag, size = 0x4, scoped, tag = 'scoped memory for tpu_custom_call.1']
    #allocation7 [shape = 'u8[16384]{0}', space=vmem, size = 0x4000, scoped, tag = 'input window, operand 3, single buffered']
    #allocation8 [shape = 'u8[16384]{0}', space=vmem, size = 0x4000, scoped, tag = 'input window, operand 5, single buffered']
    #allocation9 [shape = 's32[1]{0}', space=sflag, size = 0x4, scoped, tag = 'scoped memory for tpu_custom_call.1']
    #allocation10 [shape = 'u8[32768]{0}', space=vmem, size = 0x8000, scoped, tag = 'input window, operand 7, single buffered']
    #allocation11 [shape = 'u8[65536]{0}', space=vmem, size = 0x10000, scoped, tag = 'output window, operand 0']
    %13 = vsyncpa [#allocation3], 0
    %s14 = scalar_lea.sflag [#allocation3], 1
    %15 = vsyncpa %s14, 0
    %16 = vsyncpa [#allocation6], 0
    %17 = vsyncpa [#allocation9], 0
    %18 = vsyncpa [#allocation4], 0
    %s19 = scalar_lea.sflag [#allocation4], 1
    %20 = vsyncpa %s19, 0
    loop: start=0, step=1, limit=4
    $region2: #{tpu_custom_call.1} parent=1 // loop_pre_header
      _
    $region3: #{tpu_custom_call.1} parent=1 // loop_header
      %s22 = sphi 0, %s26
      %p23 = scmp.ge.s32.totalorder %s22, 4
      %s32 = sphi 0, %s34
      %s35 = sphi 0, %s32
      %s36 = sphi 0, %s35
      %s52 = sphi 0, %s36
      %s56 = sphi 0, %s56
      %s58 = sphi 0, %s56
      %s59 = sphi 0, %s58
      %s73 = sphi 0, %s59
      %s77 = sphi 0, %s77
      %s79 = sphi 0, %s77
      %s80 = sphi 0, %s79
      %s94 = sphi 0, %s80
      %s98 = sphi 0, %s98
      %s100 = sphi 0, %s98
      %s101 = sphi 0, %s100
      %s115 = sphi 0, %s101
      %s119 = sphi 0, %s119
      %s121 = sphi 0, %s119
      %s122 = sphi 0, %s121
      %s136 = sphi 0, %s122
      %s140 = sphi 0, %s140
      %s142 = sphi 0, %s140
      %s143 = sphi 0, %s142
      %s157 = sphi 0, %s143
      %s161 = sphi 0, %s161
      %s163 = sphi 0, %s161
      %s164 = sphi 0, %s163
      %s178 = sphi 0, %s164
      %s182 = sphi 0, %s182
      %s184 = sphi 0, %s182
      %s185 = sphi 0, %s184
      %s199 = sphi 0, %s185
      %s205 = sphi 0, %s207
      %s208 = sphi 0, %s205
      %s209 = sphi 0, %s208
      %s225 = sphi 0, %s209
    $region4: #{tpu_custom_call.1} parent=1 // loop_header_branch
      %25 = sbr.rel (%p23) target = $region8
    $region5: #{tpu_custom_call.1} parent=1 // loop_body
      %s27 = ssub.s32 %s22, 1
      %s28 = ssub.s32 %s22, 2
      %s29 = sadd.s32 %s22, 1
      %s30 = ssub.s32 %s22, %s29
      %p31 = scmp.eq.s32.totalorder %s30, 0
      %s33 = sadd.s32 %s32, 1
      %s34 = scalar_select %p31, %s32, %s33
      %p37 = pneg %p31
      %p38 = scmp.eq.s32.totalorder %s22, 1
      %p39 = por %p37, %p38
      %p40 = scmp.ne.s32.totalorder %s32, %s35
      %p41 = scmp.eq.s32.totalorder %s22, 0
      %p42 = por %p40, %p41
      %p43 = scmp.ne.s32.totalorder %s32, %s35
      %p44 = scmp.eq.s32.totalorder %s27, 1
      %p45 = por %p43, %p44
      %p46 = scmp.ne.s32.totalorder %s35, %s36
      %p47 = scmp.eq.s32.totalorder %s27, 0
      %p48 = por %p46, %p47
      %p49 = scmp.ne.s32.totalorder %s35, %s36
      %p50 = scmp.eq.s32.totalorder %s28, 1
      %p51 = por %p49, %p50
      %p53 = scmp.ne.s32.totalorder %s36, %s52
      %p54 = scmp.eq.s32.totalorder %s28, 0
      %p55 = por %p53, %p54
      %s57 = sadd.s32 %s56, 1
      %p60 = scmp.eq.s32.totalorder %s22, 1
      %p61 = scmp.ne.s32.totalorder %s56, %s58
      %p62 = scmp.eq.s32.totalorder %s22, 0
      %p63 = por %p61, %p62
      %p64 = scmp.ne.s32.totalorder %s56, %s58
      %p65 = scmp.eq.s32.totalorder %s27, 1
      %p66 = por %p64, %p65
      %p67 = scmp.ne.s32.totalorder %s58, %s59
      %p68 = scmp.eq.s32.totalorder %s27, 0
      %p69 = por %p67, %p68
      %p70 = scmp.ne.s32.totalorder %s58, %s59
      %p71 = scmp.eq.s32.totalorder %s28, 1
      %p72 = por %p70, %p71
      %p74 = scmp.ne.s32.totalorder %s59, %s73
      %p75 = scmp.eq.s32.totalorder %s28, 0
      %p76 = por %p74, %p75
      %s78 = sadd.s32 %s77, 1
      %p81 = scmp.eq.s32.totalorder %s22, 1
      %p82 = scmp.ne.s32.totalorder %s77, %s79
      %p83 = scmp.eq.s32.totalorder %s22, 0
      %p84 = por %p82, %p83
      %p85 = scmp.ne.s32.totalorder %s77, %s79
      %p86 = scmp.eq.s32.totalorder %s27, 1
      %p87 = por %p85, %p86
      %p88 = scmp.ne.s32.totalorder %s79, %s80
      %p89 = scmp.eq.s32.totalorder %s27, 0
      %p90 = por %p88, %p89
      %p91 = scmp.ne.s32.totalorder %s79, %s80
      %p92 = scmp.eq.s32.totalorder %s28, 1
      %p93 = por %p91, %p92
      %p95 = scmp.ne.s32.totalorder %s80, %s94
      %p96 = scmp.eq.s32.totalorder %s28, 0
      %p97 = por %p95, %p96
      %s99 = sadd.s32 %s98, 1
      %p102 = scmp.eq.s32.totalorder %s22, 1
      %p103 = scmp.ne.s32.totalorder %s98, %s100
      %p104 = scmp.eq.s32.totalorder %s22, 0
      %p105 = por %p103, %p104
      %p106 = scmp.ne.s32.totalorder %s98, %s100
      %p107 = scmp.eq.s32.totalorder %s27, 1
      %p108 = por %p106, %p107
      %p109 = scmp.ne.s32.totalorder %s100, %s101
      %p110 = scmp.eq.s32.totalorder %s27, 0
      %p111 = por %p109, %p110
      %p112 = scmp.ne.s32.totalorder %s100, %s101
      %p113 = scmp.eq.s32.totalorder %s28, 1
      %p114 = por %p112, %p113
      %p116 = scmp.ne.s32.totalorder %s101, %s115
      %p117 = scmp.eq.s32.totalorder %s28, 0
      %p118 = por %p116, %p117
      %s120 = sadd.s32 %s119, 1
      %p123 = scmp.eq.s32.totalorder %s22, 1
      %p124 = scmp.ne.s32.totalorder %s119, %s121
      %p125 = scmp.eq.s32.totalorder %s22, 0
      %p126 = por %p124, %p125
      %p127 = scmp.ne.s32.totalorder %s119, %s121
      %p128 = scmp.eq.s32.totalorder %s27, 1
      %p129 = por %p127, %p128
      %p130 = scmp.ne.s32.totalorder %s121, %s122
      %p131 = scmp.eq.s32.totalorder %s27, 0
      %p132 = por %p130, %p131
      %p133 = scmp.ne.s32.totalorder %s121, %s122
      %p134 = scmp.eq.s32.totalorder %s28, 1
      %p135 = por %p133, %p134
      %p137 = scmp.ne.s32.totalorder %s122, %s136
      %p138 = scmp.eq.s32.totalorder %s28, 0
      %p139 = por %p137, %p138
      %s141 = sadd.s32 %s140, 1
      %p144 = scmp.eq.s32.totalorder %s22, 1
      %p145 = scmp.ne.s32.totalorder %s140, %s142
      %p146 = scmp.eq.s32.totalorder %s22, 0
      %p147 = por %p145, %p146
      %p148 = scmp.ne.s32.totalorder %s140, %s142
      %p149 = scmp.eq.s32.totalorder %s27, 1
      %p150 = por %p148, %p149
      %p151 = scmp.ne.s32.totalorder %s142, %s143
      %p152 = scmp.eq.s32.totalorder %s27, 0
      %p153 = por %p151, %p152
      %p154 = scmp.ne.s32.totalorder %s142, %s143
      %p155 = scmp.eq.s32.totalorder %s28, 1
      %p156 = por %p154, %p155
      %p158 = scmp.ne.s32.totalorder %s143, %s157
      %p159 = scmp.eq.s32.totalorder %s28, 0
      %p160 = por %p158, %p159
      %s162 = sadd.s32 %s161, 1
      %p165 = scmp.eq.s32.totalorder %s22, 1
      %p166 = scmp.ne.s32.totalorder %s161, %s163
      %p167 = scmp.eq.s32.totalorder %s22, 0
      %p168 = por %p166, %p167
      %p169 = scmp.ne.s32.totalorder %s161, %s163
      %p170 = scmp.eq.s32.totalorder %s27, 1
      %p171 = por %p169, %p170
      %p172 = scmp.ne.s32.totalorder %s163, %s164
      %p173 = scmp.eq.s32.totalorder %s27, 0
      %p174 = por %p172, %p173
      %p175 = scmp.ne.s32.totalorder %s163, %s164
      %p176 = scmp.eq.s32.totalorder %s28, 1
      %p177 = por %p175, %p176
      %p179 = scmp.ne.s32.totalorder %s164, %s178
      %p180 = scmp.eq.s32.totalorder %s28, 0
      %p181 = por %p179, %p180
      %s183 = sadd.s32 %s182, 1
      %p186 = scmp.eq.s32.totalorder %s22, 1
      %p187 = scmp.ne.s32.totalorder %s182, %s184
      %p188 = scmp.eq.s32.totalorder %s22, 0
      %p189 = por %p187, %p188
      %p190 = scmp.ne.s32.totalorder %s182, %s184
      %p191 = scmp.eq.s32.totalorder %s27, 1
      %p192 = por %p190, %p191
      %p193 = scmp.ne.s32.totalorder %s184, %s185
      %p194 = scmp.eq.s32.totalorder %s27, 0
      %p195 = por %p193, %p194
      %p196 = scmp.ne.s32.totalorder %s184, %s185
      %p197 = scmp.eq.s32.totalorder %s28, 1
      %p198 = por %p196, %p197
      %p200 = scmp.ne.s32.totalorder %s185, %s199
      %p201 = scmp.eq.s32.totalorder %s28, 0
      %p202 = por %p200, %p201
      %s203 = ssub.s32 %s22, %s29
      %p204 = scmp.eq.s32.totalorder %s203, 0
      %s206 = sadd.s32 %s205, 1
      %s207 = scalar_select %p204, %s205, %s206
      %p210 = pneg %p204
      %p211 = scmp.eq.s32.totalorder %s22, 1
      %p212 = por %p210, %p211
      %p213 = scmp.ne.s32.totalorder %s205, %s208
      %p214 = scmp.eq.s32.totalorder %s22, 0
      %p215 = por %p213, %p214
      %p216 = scmp.ne.s32.totalorder %s205, %s208
      %p217 = scmp.eq.s32.totalorder %s27, 1
      %p218 = por %p216, %p217
      %p219 = scmp.ne.s32.totalorder %s208, %s209
      %p220 = scmp.eq.s32.totalorder %s27, 0
      %p221 = por %p219, %p220
      %p222 = scmp.ne.s32.totalorder %s208, %s209
      %p223 = scmp.eq.s32.totalorder %s28, 1
      %p224 = por %p222, %p223
      %p226 = scmp.ne.s32.totalorder %s209, %s225
      %p227 = scmp.eq.s32.totalorder %s28, 0
      %p228 = por %p226, %p227
      %p229 = scmp.le.s32.totalorder 1, %s22
      %p230 = scmp.lt.s32.totalorder %s22, 3
      %p231 = pnand %p229, %p230
      %p232 = pneg %p231
      // Predicated region
      $region9: #{tpu_custom_call.1} parent=5 // pred_check
        _
      $region10: #{tpu_custom_call.1} parent=5 // pred_check_branch
        %234 = sbr.rel (%p231) target = $region12
      $region11: #{tpu_custom_call.1} parent=5 // pred_region
        %s235 = ssub.s32 %s22, 1
        // Predicated region
        $region13: #{tpu_custom_call.1} parent=11 // pred_check
          %p236 = pneg %p69
        $region14: #{tpu_custom_call.1} parent=11 // pred_check_branch
          %238 = sbr.rel (%p236) target = $region16
        $region15: #{tpu_custom_call.1} parent=11 // pred_region
          %240 = vsyncadd [#allocation6], 0
          %s242 = sshll.u32 %s1, 4
          %s243 = int_to_ptr.hbm [resolvable:$true] %s242
          %s244 = sshll.u32 [#allocation5], 4
          %s245 = int_to_ptr.vmem [resolvable:$true] %s244
          %247 = dma.hbm_to_vmem [thread:$0]  %s243, 16, %s245, [#allocation6]
        $region16: #{tpu_custom_call.1} parent=11 // pred_fallthru
          _
        // Predicated region
        $region17: #{tpu_custom_call.1} parent=11 // pred_check
          %p248 = pneg %p90
        $region18: #{tpu_custom_call.1} parent=11 // pred_check_branch
          %250 = sbr.rel (%p248) target = $region20
        $region19: #{tpu_custom_call.1} parent=11 // pred_region
          _
        $region20: #{tpu_custom_call.1} parent=11 // pred_fallthru
          _
        // Predicated region
        $region21: #{tpu_custom_call.1} parent=11 // pred_check
          %p251 = pneg %p111
        $region22: #{tpu_custom_call.1} parent=11 // pred_check_branch
          %253 = sbr.rel (%p251) target = $region24
        $region23: #{tpu_custom_call.1} parent=11 // pred_region
          %255 = vsyncadd [#allocation6], 0
          %s256 = sshll.u32 %s3, 4
          %s257 = int_to_ptr.hbm [resolvable:$true] %s256
          %s258 = sshll.u32 [#allocation7], 4
          %s259 = int_to_ptr.vmem [resolvable:$true] %s258
          %264 = dma.hbm_to_vmem [thread:$0]  %s257, 512, %s259, [#allocation6], 128, 128, 8
        $region24: #{tpu_custom_call.1} parent=11 // pred_fallthru
          _
        // Predicated region
        $region25: #{tpu_custom_call.1} parent=11 // pred_check
          %p265 = pneg %p132
        $region26: #{tpu_custom_call.1} parent=11 // pred_check_branch
          %267 = sbr.rel (%p265) target = $region28
        $region27: #{tpu_custom_call.1} parent=11 // pred_region
          _
        $region28: #{tpu_custom_call.1} parent=11 // pred_fallthru
          _
        // Predicated region
        $region29: #{tpu_custom_call.1} parent=11 // pred_check
          %p268 = pneg %p153
        $region30: #{tpu_custom_call.1} parent=11 // pred_check_branch
          %270 = sbr.rel (%p268) target = $region32
        $region31: #{tpu_custom_call.1} parent=11 // pred_region
          %272 = vsyncadd [#allocation9], 0
          %s273 = sshll.u32 %s5, 4
          %s274 = int_to_ptr.hbm [resolvable:$true] %s273
          %s275 = sshll.u32 [#allocation8], 4
          %s276 = int_to_ptr.vmem [resolvable:$true] %s275
          %281 = dma.hbm_to_vmem [thread:$0]  %s274, 512, %s276, [#allocation9], 128, 128, 8
        $region32: #{tpu_custom_call.1} parent=11 // pred_fallthru
          _
        // Predicated region
        $region33: #{tpu_custom_call.1} parent=11 // pred_check
          %p282 = pneg %p174
        $region34: #{tpu_custom_call.1} parent=11 // pred_check_branch
          %284 = sbr.rel (%p282) target = $region36
        $region35: #{tpu_custom_call.1} parent=11 // pred_region
          _
        $region36: #{tpu_custom_call.1} parent=11 // pred_fallthru
          _
        // Predicated region
        $region37: #{tpu_custom_call.1} parent=11 // pred_check
          %p285 = pneg %p195
        $region38: #{tpu_custom_call.1} parent=11 // pred_check_branch
          %287 = sbr.rel (%p285) target = $region40
        $region39: #{tpu_custom_call.1} parent=11 // pred_region
          %289 = vsyncadd [#allocation9], 0
          %s290 = sshll.u32 %s7, 4
          %s291 = int_to_ptr.hbm [resolvable:$true] %s290
          %s292 = sshll.u32 [#allocation10], 4
          %s293 = int_to_ptr.vmem [resolvable:$true] %s292
          %298 = dma.hbm_to_vmem [thread:$0]  %s291, 1024, %s293, [#allocation9], 128, 128, 8
        $region40: #{tpu_custom_call.1} parent=11 // pred_fallthru
          _
      $region12: #{tpu_custom_call.1} parent=5 // pred_fallthru
        _
      %p299 = scmp.lt.s32.totalorder %s22, 2
      // Predicated region
      $region41: #{tpu_custom_call.1} parent=5 // pred_check
        %p300 = pneg %p299
      $region42: #{tpu_custom_call.1} parent=5 // pred_check_branch
        %302 = sbr.rel (%p300) target = $region44
      $region43: #{tpu_custom_call.1} parent=5 // pred_region
        // Predicated region
        $region45: #{tpu_custom_call.1} parent=43 // pred_check
          %p303 = pneg %p42
        $region46: #{tpu_custom_call.1} parent=43 // pred_check_branch
          %305 = sbr.rel (%p303) target = $region48
        $region47: #{tpu_custom_call.1} parent=43 // pred_region
          %s306 = sand.u32 %s32, 1
          %s307 = scalar_lea.sflag [#allocation3], %s306
          %s308 = sand.u32 %s32, 1
          %s309 = smul.addr %s308, 64
          %s310 = scalar_lea.vmem [#allocation2], %s309
          %s311 = smul.u32 4, %s22
          %313 = vsyncadd %s307, 0
          %s314 = smul.addr %s311, 2
          %s315 = smul.addr %s314, 8
          %s316 = scalar_lea.hbm %s0, %s315
          %s317 = sshll.u32 %s316, 4
          %s318 = int_to_ptr.hbm [resolvable:$true] %s317
          %s319 = sshll.u32 %s310, 4
          %s320 = int_to_ptr.vmem [resolvable:$true] %s319
          %325 = dma.hbm_to_vmem [thread:$0]  %s318, 1024, %s320, %s307, 128, 128, 8
        $region48: #{tpu_custom_call.1} parent=43 // pred_fallthru
          _
      $region44: #{tpu_custom_call.1} parent=5 // pred_fallthru
        _
      %p326 = scmp.le.s32.totalorder 1, %s22
      %p327 = scmp.lt.s32.totalorder %s22, 3
      %p328 = pnand %p326, %p327
      %p329 = pneg %p328
      // Predicated region
      $region49: #{tpu_custom_call.1} parent=5 // pred_check
        _
      $region50: #{tpu_custom_call.1} parent=5 // pred_check_branch
        %331 = sbr.rel (%p328) target = $region52
      $region51: #{tpu_custom_call.1} parent=5 // pred_region
        %s332 = ssub.s32 %s22, 1
        %s333 = sand.u32 %s35, 1
        %s334 = scalar_lea.sflag [#allocation3], %s333
        %s335 = sand.u32 %s35, 1
        %s336 = smul.addr %s335, 64
        %s337 = scalar_lea.vmem [#allocation2], %s336
        // Predicated region
        $region53: #{tpu_custom_call.1} parent=51 // pred_check
          %p338 = pneg %p48
        $region54: #{tpu_custom_call.1} parent=51 // pred_check_branch
          %340 = sbr.rel (%p338) target = $region56
        $region55: #{tpu_custom_call.1} parent=51 // pred_region
          %342 = dma.done %s334, 1024
        $region56: #{tpu_custom_call.1} parent=51 // pred_fallthru
          _
        // Predicated region
        $region57: #{tpu_custom_call.1} parent=51 // pred_check
          %p343 = pneg %p69
        $region58: #{tpu_custom_call.1} parent=51 // pred_check_branch
          %345 = sbr.rel (%p343) target = $region60
        $region59: #{tpu_custom_call.1} parent=51 // pred_region
          %347 = dma.done [#allocation6], 16
        $region60: #{tpu_custom_call.1} parent=51 // pred_fallthru
          _
        // Predicated region
        $region61: #{tpu_custom_call.1} parent=51 // pred_check
          %p348 = pneg %p111
        $region62: #{tpu_custom_call.1} parent=51 // pred_check_branch
          %350 = sbr.rel (%p348) target = $region64
        $region63: #{tpu_custom_call.1} parent=51 // pred_region
          %352 = dma.done [#allocation6], 512
        $region64: #{tpu_custom_call.1} parent=51 // pred_fallthru
          _
        // Predicated region
        $region65: #{tpu_custom_call.1} parent=51 // pred_check
          %p353 = pneg %p153
        $region66: #{tpu_custom_call.1} parent=51 // pred_check_branch
          %355 = sbr.rel (%p353) target = $region68
        $region67: #{tpu_custom_call.1} parent=51 // pred_region
          %357 = dma.done [#allocation9], 512
        $region68: #{tpu_custom_call.1} parent=51 // pred_fallthru
          _
        // Predicated region
        $region69: #{tpu_custom_call.1} parent=51 // pred_check
          %p358 = pneg %p195
        $region70: #{tpu_custom_call.1} parent=51 // pred_check_branch
          %360 = sbr.rel (%p358) target = $region72
        $region71: #{tpu_custom_call.1} parent=51 // pred_region
          %362 = dma.done [#allocation9], 1024
        $region72: #{tpu_custom_call.1} parent=51 // pred_fallthru
          _
        %s363 = sand.u32 %s35, 1
        %s364 = scalar_lea.sflag [#allocation3], %s363
        %s365 = sand.u32 %s35, 1
        %s366 = smul.addr %s365, 64
        %s367 = scalar_lea.vmem [#allocation2], %s366
        %p368 = pneg %p48
        %p369 = pneg %p45
        %p370 = pneg %p69
        %p371 = pneg %p66
        %p372 = pneg %p90
        %p373 = pneg %p87
        %p374 = pneg %p111
        %p375 = pneg %p108
        %p376 = pneg %p132
        %p377 = pneg %p129
        %p378 = pneg %p153
        %p379 = pneg %p150
        %p380 = pneg %p174
        %p381 = pneg %p171
        %p382 = pneg %p195
        %p383 = pneg %p192
        %p384 = pneg %p221
        %p385 = pneg %p218
        %s386 = sand.u32 %s208, 1
        %s387 = scalar_lea.sflag [#allocation4], %s386
        %s388 = sand.u32 %s208, 1
        %s389 = smul.addr %s388, 64
        %s390 = scalar_lea.vmem [#allocation11], %s389
        %s391 = smul.u32 4, %s27
        %s392 = smul.u32 4, %s27
        %v393 = vld [vmem:[%s337] sm:$0xff]
        %v394 = vld [vmem:[%s337 + $0x8] sm:$0xff]
        %v395 = vld [vmem:[%s337 + $0x10] sm:$0xff]
        %v396 = vld [vmem:[%s337 + $0x18] sm:$0xff]
        %v397 = vld [vmem:[%s337 + $0x20] sm:$0xff]
        %v398 = vld [vmem:[%s337 + $0x28] sm:$0xff]
        %v399 = vld [vmem:[%s337 + $0x30] sm:$0xff]
        %v400 = vld [vmem:[%s337 + $0x38] sm:$0xff]
        %v401 = vld [vmem:[#allocation5] sm:$0x1]
        %v402 = vld [vmem:[%s2] sm:$0x1]
        %vm403 = vcmask 261120
        %v404 = vsel %vm403, %v393, 0.0
        %405 = vadd.xlane.f32.xlu0 %v404
        %v406 = vpop.xlane.xlu0 %405
        %v407 = vsel %vm403, %v394, 0.0
        %408 = vadd.xlane.f32.xlu0 %v407
        %v409 = vpop.xlane.xlu0 %408
        %v410 = vsel %vm403, %v395, 0.0
        %411 = vadd.xlane.f32.xlu0 %v410
        %v412 = vpop.xlane.xlu0 %411
        %v413 = vsel %vm403, %v396, 0.0
        %414 = vadd.xlane.f32.xlu0 %v413
        %v415 = vpop.xlane.xlu0 %414
        %v416 = vsel %vm403, %v397, 0.0
        %417 = vadd.xlane.f32.xlu0 %v416
        %v418 = vpop.xlane.xlu0 %417
        %v419 = vsel %vm403, %v398, 0.0
        %420 = vadd.xlane.f32.xlu0 %v419
        %v421 = vpop.xlane.xlu0 %420
        %v422 = vsel %vm403, %v399, 0.0
        %423 = vadd.xlane.f32.xlu0 %v422
        %v424 = vpop.xlane.xlu0 %423
        %v425 = vsel %vm403, %v400, 0.0
        %426 = vadd.xlane.f32.xlu0 %v425
        %v427 = vpop.xlane.xlu0 %426
        %v428 = vrcp.pop 32.0
        %v429 = vmul.f32 32.0, %v428
        %v430 = vsub.f32 1.0, %v429
        %v431 = vmul.f32 %v428, %v430
        %v432 = vadd.f32 %v428, %v431
        %vm433 = vweird.f32 %v428
        %v434 = vsel %vm433, %v428, %v432
        %v435 = vmul.f32 %v406, %v434
        %v436 = vmul.f32 %v409, %v434
        %v437 = vmul.f32 %v412, %v434
        %v438 = vmul.f32 %v415, %v434
        %v439 = vmul.f32 %v418, %v434
        %v440 = vmul.f32 %v421, %v434
        %v441 = vmul.f32 %v424, %v434
        %v442 = vmul.f32 %v427, %v434
        %v443 = vsub.f32 %v393, %v435
        %v444 = vsub.f32 %v394, %v436
        %v445 = vsub.f32 %v395, %v437
        %v446 = vsub.f32 %v396, %v438
        %v447 = vsub.f32 %v397, %v439
        %v448 = vsub.f32 %v398, %v440
        %v449 = vsub.f32 %v399, %v441
        %v450 = vsub.f32 %v400, %v442
        %v451 = vmul.f32 %v443, %v443
        %v452 = vmul.f32 %v444, %v444
        %v453 = vmul.f32 %v445, %v445
        %v454 = vmul.f32 %v446, %v446
        %v455 = vmul.f32 %v447, %v447
        %v456 = vmul.f32 %v448, %v448
        %v457 = vmul.f32 %v449, %v449
        %v458 = vmul.f32 %v450, %v450
        %v459 = vsel %vm403, %v451, 0.0
        %460 = vadd.xlane.f32.xlu0 %v459
        %v461 = vpop.xlane.xlu0 %460
        %v462 = vsel %vm403, %v452, 0.0
        %463 = vadd.xlane.f32.xlu0 %v462
        %v464 = vpop.xlane.xlu0 %463
        %v465 = vsel %vm403, %v453, 0.0
        %466 = vadd.xlane.f32.xlu0 %v465
        %v467 = vpop.xlane.xlu0 %466
        %v468 = vsel %vm403, %v454, 0.0
        %469 = vadd.xlane.f32.xlu0 %v468
        %v470 = vpop.xlane.xlu0 %469
        %v471 = vsel %vm403, %v455, 0.0
        %472 = vadd.xlane.f32.xlu0 %v471
        %v473 = vpop.xlane.xlu0 %472
        %v474 = vsel %vm403, %v456, 0.0
        %475 = vadd.xlane.f32.xlu0 %v474
        %v476 = vpop.xlane.xlu0 %475
        %v477 = vsel %vm403, %v457, 0.0
        %478 = vadd.xlane.f32.xlu0 %v477
        %v479 = vpop.xlane.xlu0 %478
        %v480 = vsel %vm403, %v458, 0.0
        %481 = vadd.xlane.f32.xlu0 %v480
        %v482 = vpop.xlane.xlu0 %481
        %v483 = vmul.f32 %v461, %v434
        %v484 = vmul.f32 %v464, %v434
        %v485 = vmul.f32 %v467, %v434
        %v486 = vmul.f32 %v470, %v434
        %v487 = vmul.f32 %v473, %v434
        %v488 = vmul.f32 %v476, %v434
        %v489 = vmul.f32 %v479, %v434
        %v490 = vmul.f32 %v482, %v434
        %v491 = vadd.f32 %v483, 1e-05
        %v492 = vadd.f32 %v484, 1e-05
        %v493 = vadd.f32 %v485, 1e-05
        %v494 = vadd.f32 %v486, 1e-05
        %v495 = vadd.f32 %v487, 1e-05
        %v496 = vadd.f32 %v488, 1e-05
        %v497 = vadd.f32 %v489, 1e-05
        %v498 = vadd.f32 %v490, 1e-05
        %v499 = vrsqrt.pop %v491
        %v500 = vmul.f32 %v499, %v491
        %v501 = vmul.f32 %v500, %v499
        %v502 = vmul.f32 0.5, %v501
        %v503 = vsub.f32 1.5, %v502
        %v504 = vmul.f32 %v499, %v503
        %vm505 = vweird.f32 %v491
        %vm506 = vweird.f32 %v499
        %vm507 = vmor %vm505, %vm506
        %v508 = vsel %vm507, %v499, %v504
        %v509 = vrsqrt.pop %v492
        %v510 = vmul.f32 %v509, %v492
        %v511 = vmul.f32 %v510, %v509
        %v512 = vmul.f32 0.5, %v511
        %v513 = vsub.f32 1.5, %v512
        %v514 = vmul.f32 %v509, %v513
        %vm515 = vweird.f32 %v492
        %vm516 = vweird.f32 %v509
        %vm517 = vmor %vm515, %vm516
        %v518 = vsel %vm517, %v509, %v514
        %v519 = vrsqrt.pop %v493
        %v520 = vmul.f32 %v519, %v493
        %v521 = vmul.f32 %v520, %v519
        %v522 = vmul.f32 0.5, %v521
        %v523 = vsub.f32 1.5, %v522
        %v524 = vmul.f32 %v519, %v523
        %vm525 = vweird.f32 %v493
        %vm526 = vweird.f32 %v519
        %vm527 = vmor %vm525, %vm526
        %v528 = vsel %vm527, %v519, %v524
        %v529 = vrsqrt.pop %v494
        %v530 = vmul.f32 %v529, %v494
        %v531 = vmul.f32 %v530, %v529
        %v532 = vmul.f32 0.5, %v531
        %v533 = vsub.f32 1.5, %v532
        %v534 = vmul.f32 %v529, %v533
        %vm535 = vweird.f32 %v494
        %vm536 = vweird.f32 %v529
        %vm537 = vmor %vm535, %vm536
        %v538 = vsel %vm537, %v529, %v534
        %v539 = vrsqrt.pop %v495
        %v540 = vmul.f32 %v539, %v495
        %v541 = vmul.f32 %v540, %v539
        %v542 = vmul.f32 0.5, %v541
        %v543 = vsub.f32 1.5, %v542
        %v544 = vmul.f32 %v539, %v543
        %vm545 = vweird.f32 %v495
        %vm546 = vweird.f32 %v539
        %vm547 = vmor %vm545, %vm546
        %v548 = vsel %vm547, %v539, %v544
        %v549 = vrsqrt.pop %v496
        %v550 = vmul.f32 %v549, %v496
        %v551 = vmul.f32 %v550, %v549
        %v552 = vmul.f32 0.5, %v551
        %v553 = vsub.f32 1.5, %v552
        %v554 = vmul.f32 %v549, %v553
        %vm555 = vweird.f32 %v496
        %vm556 = vweird.f32 %v549
        %vm557 = vmor %vm555, %vm556
        %v558 = vsel %vm557, %v549, %v554
        %v559 = vrsqrt.pop %v497
        %v560 = vmul.f32 %v559, %v497
        %v561 = vmul.f32 %v560, %v559
        %v562 = vmul.f32 0.5, %v561
        %v563 = vsub.f32 1.5, %v562
        %v564 = vmul.f32 %v559, %v563
        %vm565 = vweird.f32 %v497
        %vm566 = vweird.f32 %v559
        %vm567 = vmor %vm565, %vm566
        %v568 = vsel %vm567, %v559, %v564
        %v569 = vrsqrt.pop %v498
        %v570 = vmul.f32 %v569, %v498
        %v571 = vmul.f32 %v570, %v569
        %v572 = vmul.f32 0.5, %v571
        %v573 = vsub.f32 1.5, %v572
        %v574 = vmul.f32 %v569, %v573
        %vm575 = vweird.f32 %v498
        %vm576 = vweird.f32 %v569
        %vm577 = vmor %vm575, %vm576
        %v578 = vsel %vm577, %v569, %v574
        %v579 = vmul.f32 %v443, %v508
        %v580 = vmul.f32 %v444, %v518
        %v581 = vmul.f32 %v445, %v528
        %v582 = vmul.f32 %v446, %v538
        %v583 = vmul.f32 %v447, %v548
        %v584 = vmul.f32 %v448, %v558
        %v585 = vmul.f32 %v449, %v568
        %v586 = vmul.f32 %v450, %v578
        %v588 = vperm.slane %v401, 0
        %v590 = vmul.f32 %v579, %v588
        %v591 = vmul.f32 %v580, %v588
        %v592 = vmul.f32 %v581, %v588
        %v593 = vmul.f32 %v582, %v588
        %v594 = vmul.f32 %v583, %v588
        %v595 = vmul.f32 %v584, %v588
        %v596 = vmul.f32 %v585, %v588
        %v597 = vmul.f32 %v586, %v588
        %v599 = vperm.slane %v402, 0
        %v601 = vadd.f32 %v590, %v599
        %v602 = vadd.f32 %v591, %v599
        %v603 = vadd.f32 %v592, %v599
        %v604 = vadd.f32 %v593, %v599
        %v605 = vadd.f32 %v594, %v599
        %v606 = vadd.f32 %v595, %v599
        %v607 = vadd.f32 %v596, %v599
        %v608 = vadd.f32 %v597, %v599
        %v609 = vld [vmem:[#allocation7] sm:$0xff]
        %v610 = vld [vmem:[#allocation7 + $0x8] sm:$0xff]
        %v611 = vld [vmem:[#allocation7 + $0x10] sm:$0xff]
        %v612 = vld [vmem:[#allocation7 + $0x18] sm:$0xff]
        %v613 = vld [vmem:[%s4] sm:$0x1]
        %v615 = vperm.slane %v613, 0
        %v618 = vsel %vm403, %v601, 0
        %v621 = vsel %vm403, %v602, 0
        %v624 = vsel %vm403, %v603, 0
        %v627 = vsel %vm403, %v604, 0
        %v630 = vsel %vm403, %v605, 0
        %v633 = vsel %vm403, %v606, 0
        %v636 = vsel %vm403, %v607, 0
        %v639 = vsel %vm403, %v608, 0
        %641 = vmatpush.msra.mxu0 0.0
        %642 = vmatpush.msra.mxu0 0.0
        %643 = vmatpush.msra.mxu0 0.0
        %644 = vmatpush.msra.mxu0 0.0
        %645 = vmatpush.msra.mxu0 0.0
        %646 = vmatpush.msra.mxu0 0.0
        %647 = vmatpush.msra.mxu0 0.0
        %648 = vmatpush.msra.mxu0 0.0
        %649 = vmatpush.msra.mxu0 0.0
        %650 = vmatpush.msra.mxu0 0.0
        %651 = vmatpush.msra.mxu0 0.0
        %652 = vmatpush.msra.mxu0 0.0
        %653 = vmatpush.msra.mxu0 %v612
        %654 = vmatpush.msra.mxu0 %v611
        %655 = vmatpush.msra.mxu0 %v610
        %656 = vmatpush.msra.mxu0 %v609
        %657 = vmatmul.f32.gmra.mxu0 %v618
        %v658 = vpop.f32.mrf.mxu0
        %v659 = vadd.f32 %v615, %v658
        %660 = vmatmul.f32.gmra.mxu0 %v621
        %v661 = vpop.f32.mrf.mxu0
        %v662 = vadd.f32 %v615, %v661
        %663 = vmatmul.f32.gmra.mxu0 %v624
        %v664 = vpop.f32.mrf.mxu0
        %v665 = vadd.f32 %v615, %v664
        %666 = vmatmul.f32.gmra.mxu0 %v627
        %v667 = vpop.f32.mrf.mxu0
        %v668 = vadd.f32 %v615, %v667
        %669 = vmatmul.f32.gmra.mxu0 %v630
        %v670 = vpop.f32.mrf.mxu0
        %v671 = vadd.f32 %v615, %v670
        %672 = vmatmul.f32.gmra.mxu0 %v633
        %v673 = vpop.f32.mrf.mxu0
        %v674 = vadd.f32 %v615, %v673
        %675 = vmatmul.f32.gmra.mxu0 %v636
        %v676 = vpop.f32.mrf.mxu0
        %v677 = vadd.f32 %v615, %v676
        %678 = vmatmul.f32.gmra.mxu0 %v639
        %v679 = vpop.f32.mrf.mxu0
        %v680 = vadd.f32 %v615, %v679
        %681 = vdwg.mxu0
        %v682 = vld [vmem:[#allocation10] sm:$0xff]
        %v683 = vld [vmem:[#allocation10 + $0x8] sm:$0xff]
        %v684 = vld [vmem:[#allocation10 + $0x10] sm:$0xff]
        %v685 = vld [vmem:[#allocation10 + $0x18] sm:$0xff]
        %v686 = vld [vmem:[#allocation10 + $0x20] sm:$0xff]
        %v687 = vld [vmem:[#allocation10 + $0x28] sm:$0xff]
        %v688 = vld [vmem:[#allocation10 + $0x30] sm:$0xff]
        %v689 = vld [vmem:[#allocation10 + $0x38] sm:$0xff]
        %692 = vrot.lane.b32.xlu0 %v659, 96
        %v693 = vpop.permute.xlu0 %692
        %694 = vrot.lane.b32.xlu0 %v662, 96
        %v695 = vpop.permute.xlu0 %694
        %vm696 = vcmask 64512
        %v697 = vsel %vm696, %v659, 0
        %v699 = vsel %vm696, %v662, 0
        %v701 = vsel %vm696, %v693, 0
        %v703 = vsel %vm696, %v695, 0
        %705 = vmatpush.xpose.msra.mxu0 0.0
        %706 = vmatpush.xpose.msra.mxu0 0.0
        %707 = vmatpush.xpose.msra.mxu0 0.0
        %708 = vmatpush.xpose.msra.mxu0 0.0
        %709 = vmatpush.xpose.msra.mxu0 0.0
        %710 = vmatpush.xpose.msra.mxu0 0.0
        %711 = vmatpush.xpose.msra.mxu0 0.0
        %712 = vmatpush.xpose.msra.mxu0 0.0
        %713 = vmatpush.xpose.msra.mxu0 0.0
        %714 = vmatpush.xpose.msra.mxu0 0.0
        %715 = vmatpush.xpose.msra.mxu0 0.0
        %716 = vmatpush.xpose.msra.mxu0 0.0
        %717 = vmatpush.xpose.msra.mxu0 0.0
        %718 = vmatpush.xpose.msra.mxu0 0.0
        %719 = vmatpush.xpose.msra.mxu0 %v703
        %720 = vmatpush.xpose.msra.mxu0 %v701
        %721 = vmatmul.f32.gmra.mxu0 %v697
        %v722 = vpop.f32.mrf.mxu0
        %v723 = vadd.f32 %v682, %v722
        %724 = vmatmul.f32.gmra.mxu0 %v699
        %v725 = vpop.f32.mrf.mxu0
        %v726 = vadd.f32 %v683, %v725
        %727 = vdwg.mxu0
        %730 = vrot.lane.b32.xlu0 %v665, 96
        %v731 = vpop.permute.xlu0 %730
        %732 = vrot.lane.b32.xlu0 %v668, 96
        %v733 = vpop.permute.xlu0 %732
        %v734 = vsel %vm696, %v665, 0
        %v736 = vsel %vm696, %v668, 0
        %v738 = vsel %vm696, %v731, 0
        %v740 = vsel %vm696, %v733, 0
        %742 = vmatpush.xpose.msra.mxu0 0.0
        %743 = vmatpush.xpose.msra.mxu0 0.0
        %744 = vmatpush.xpose.msra.mxu0 0.0
        %745 = vmatpush.xpose.msra.mxu0 0.0
        %746 = vmatpush.xpose.msra.mxu0 0.0
        %747 = vmatpush.xpose.msra.mxu0 0.0
        %748 = vmatpush.xpose.msra.mxu0 0.0
        %749 = vmatpush.xpose.msra.mxu0 0.0
        %750 = vmatpush.xpose.msra.mxu0 0.0
        %751 = vmatpush.xpose.msra.mxu0 0.0
        %752 = vmatpush.xpose.msra.mxu0 0.0
        %753 = vmatpush.xpose.msra.mxu0 0.0
        %754 = vmatpush.xpose.msra.mxu0 0.0
        %755 = vmatpush.xpose.msra.mxu0 0.0
        %756 = vmatpush.xpose.msra.mxu0 %v740
        %757 = vmatpush.xpose.msra.mxu0 %v738
        %758 = vmatmul.f32.gmra.mxu0 %v734
        %v759 = vpop.f32.mrf.mxu0
        %v760 = vadd.f32 %v682, %v759
        %761 = vmatmul.f32.gmra.mxu0 %v736
        %v762 = vpop.f32.mrf.mxu0
        %v763 = vadd.f32 %v683, %v762
        %764 = vdwg.mxu0
        %767 = vrot.lane.b32.xlu0 %v671, 96
        %v768 = vpop.permute.xlu0 %767
        %769 = vrot.lane.b32.xlu0 %v674, 96
        %v770 = vpop.permute.xlu0 %769
        %v771 = vsel %vm696, %v671, 0
        %v773 = vsel %vm696, %v674, 0
        %v775 = vsel %vm696, %v768, 0
        %v777 = vsel %vm696, %v770, 0
        %779 = vmatpush.xpose.msra.mxu0 0.0
        %780 = vmatpush.xpose.msra.mxu0 0.0
        %781 = vmatpush.xpose.msra.mxu0 0.0
        %782 = vmatpush.xpose.msra.mxu0 0.0
        %783 = vmatpush.xpose.msra.mxu0 0.0
        %784 = vmatpush.xpose.msra.mxu0 0.0
        %785 = vmatpush.xpose.msra.mxu0 0.0
        %786 = vmatpush.xpose.msra.mxu0 0.0
        %787 = vmatpush.xpose.msra.mxu0 0.0
        %788 = vmatpush.xpose.msra.mxu0 0.0
        %789 = vmatpush.xpose.msra.mxu0 0.0
        %790 = vmatpush.xpose.msra.mxu0 0.0
        %791 = vmatpush.xpose.msra.mxu0 0.0
        %792 = vmatpush.xpose.msra.mxu0 0.0
        %793 = vmatpush.xpose.msra.mxu0 %v777
        %794 = vmatpush.xpose.msra.mxu0 %v775
        %795 = vmatmul.f32.gmra.mxu0 %v771
        %v796 = vpop.f32.mrf.mxu0
        %v797 = vadd.f32 %v682, %v796
        %798 = vmatmul.f32.gmra.mxu0 %v773
        %v799 = vpop.f32.mrf.mxu0
        %v800 = vadd.f32 %v683, %v799
        %801 = vdwg.mxu0
        %804 = vrot.lane.b32.xlu0 %v677, 96
        %v805 = vpop.permute.xlu0 %804
        %806 = vrot.lane.b32.xlu0 %v680, 96
        %v807 = vpop.permute.xlu0 %806
        %v808 = vsel %vm696, %v677, 0
        %v810 = vsel %vm696, %v680, 0
        %v812 = vsel %vm696, %v805, 0
        %v814 = vsel %vm696, %v807, 0
        %816 = vmatpush.xpose.msra.mxu0 0.0
        %817 = vmatpush.xpose.msra.mxu0 0.0
        %818 = vmatpush.xpose.msra.mxu0 0.0
        %819 = vmatpush.xpose.msra.mxu0 0.0
        %820 = vmatpush.xpose.msra.mxu0 0.0
        %821 = vmatpush.xpose.msra.mxu0 0.0
        %822 = vmatpush.xpose.msra.mxu0 0.0
        %823 = vmatpush.xpose.msra.mxu0 0.0
        %824 = vmatpush.xpose.msra.mxu0 0.0
        %825 = vmatpush.xpose.msra.mxu0 0.0
        %826 = vmatpush.xpose.msra.mxu0 0.0
        %827 = vmatpush.xpose.msra.mxu0 0.0
        %828 = vmatpush.xpose.msra.mxu0 0.0
        %829 = vmatpush.xpose.msra.mxu0 0.0
        %830 = vmatpush.xpose.msra.mxu0 %v814
        %831 = vmatpush.xpose.msra.mxu0 %v812
        %832 = vmatmul.f32.gmra.mxu0 %v808
        %v833 = vpop.f32.mrf.mxu0
        %v834 = vadd.f32 %v682, %v833
        %835 = vmatmul.f32.gmra.mxu0 %v810
        %v836 = vpop.f32.mrf.mxu0
        %v837 = vadd.f32 %v683, %v836
        %838 = vdwg.mxu0
        %vm839 = vcmask 130048
        %v840 = vsel %vm839, %v723, -inf
        %841 = vmax.xlane.f32.xlu0 %v840
        %v842 = vpop.xlane.xlu0 %841
        %v843 = vsel %vm839, %v726, -inf
        %844 = vmax.xlane.f32.xlu0 %v843
        %v845 = vpop.xlane.xlu0 %844
        %v846 = vsel %vm839, %v760, -inf
        %847 = vmax.xlane.f32.xlu0 %v846
        %v848 = vpop.xlane.xlu0 %847
        %v849 = vsel %vm839, %v763, -inf
        %850 = vmax.xlane.f32.xlu0 %v849
        %v851 = vpop.xlane.xlu0 %850
        %v852 = vsel %vm839, %v797, -inf
        %853 = vmax.xlane.f32.xlu0 %v852
        %v854 = vpop.xlane.xlu0 %853
        %v855 = vsel %vm839, %v800, -inf
        %856 = vmax.xlane.f32.xlu0 %v855
        %v857 = vpop.xlane.xlu0 %856
        %v858 = vsel %vm839, %v834, -inf
        %859 = vmax.xlane.f32.xlu0 %v858
        %v860 = vpop.xlane.xlu0 %859
        %v861 = vsel %vm839, %v837, -inf
        %862 = vmax.xlane.f32.xlu0 %v861
        %v863 = vpop.xlane.xlu0 %862
        %v864 = vsub.f32 %v723, %v842
        %v865 = vsub.f32 %v726, %v845
        %v866 = vsub.f32 %v760, %v848
        %v867 = vsub.f32 %v763, %v851
        %v868 = vsub.f32 %v797, %v854
        %v869 = vsub.f32 %v800, %v857
        %v870 = vsub.f32 %v834, %v860
        %v871 = vsub.f32 %v837, %v863
        %v872 = vmul.f32 %v864, 1.442695
        %v873 = vpow.pop %v872
        %v874 = vmul.f32 %v865, 1.442695
        %v875 = vpow.pop %v874
        %v876 = vmul.f32 %v866, 1.442695
        %v877 = vpow.pop %v876
        %v878 = vmul.f32 %v867, 1.442695
        %v879 = vpow.pop %v878
        %v880 = vmul.f32 %v868, 1.442695
        %v881 = vpow.pop %v880
        %v882 = vmul.f32 %v869, 1.442695
        %v883 = vpow.pop %v882
        %v884 = vmul.f32 %v870, 1.442695
        %v885 = vpow.pop %v884
        %v886 = vmul.f32 %v871, 1.442695
        %v887 = vpow.pop %v886
        %v888 = vsel %vm839, %v873, 0.0
        %889 = vadd.xlane.f32.xlu0 %v888
        %v890 = vpop.xlane.xlu0 %889
        %v891 = vsel %vm839, %v875, 0.0
        %892 = vadd.xlane.f32.xlu0 %v891
        %v893 = vpop.xlane.xlu0 %892
        %v894 = vsel %vm839, %v877, 0.0
        %895 = vadd.xlane.f32.xlu0 %v894
        %v896 = vpop.xlane.xlu0 %895
        %v897 = vsel %vm839, %v879, 0.0
        %898 = vadd.xlane.f32.xlu0 %v897
        %v899 = vpop.xlane.xlu0 %898
        %v900 = vsel %vm839, %v881, 0.0
        %901 = vadd.xlane.f32.xlu0 %v900
        %v902 = vpop.xlane.xlu0 %901
        %v903 = vsel %vm839, %v883, 0.0
        %904 = vadd.xlane.f32.xlu0 %v903
        %v905 = vpop.xlane.xlu0 %904
        %v906 = vsel %vm839, %v885, 0.0
        %907 = vadd.xlane.f32.xlu0 %v906
        %v908 = vpop.xlane.xlu0 %907
        %v909 = vsel %vm839, %v887, 0.0
        %910 = vadd.xlane.f32.xlu0 %v909
        %v911 = vpop.xlane.xlu0 %910
        %v912 = vrcp.pop %v890
        %v913 = vmul.f32 %v890, %v912
        %v914 = vsub.f32 1.0, %v913
        %v915 = vmul.f32 %v912, %v914
        %v916 = vadd.f32 %v912, %v915
        %vm917 = vweird.f32 %v890
        %vm918 = vweird.f32 %v912
        %vm919 = vmor %vm917, %vm918
        %v920 = vsel %vm919, %v912, %v916
        %v921 = vand.u32 2147483647, %v890
        %vm922 = vcmp.eq.f32.partialorder %v921, 8.507059e+37
        %v923 = vand.u32 %v890, 2147483648
        %v924 = vor.u32 1.1754944e-38, %v923
        %v925 = vsel %vm922, %v924, %v920
        %v926 = vmul.f32 %v873, %v925
        %v927 = vrcp.pop %v893
        %v928 = vmul.f32 %v893, %v927
        %v929 = vsub.f32 1.0, %v928
        %v930 = vmul.f32 %v927, %v929
        %v931 = vadd.f32 %v927, %v930
        %vm932 = vweird.f32 %v893
        %vm933 = vweird.f32 %v927
        %vm934 = vmor %vm932, %vm933
        %v935 = vsel %vm934, %v927, %v931
        %v936 = vand.u32 2147483647, %v893
        %vm937 = vcmp.eq.f32.partialorder %v936, 8.507059e+37
        %v938 = vand.u32 %v893, 2147483648
        %v939 = vor.u32 1.1754944e-38, %v938
        %v940 = vsel %vm937, %v939, %v935
        %v941 = vmul.f32 %v875, %v940
        %v942 = vrcp.pop %v896
        %v943 = vmul.f32 %v896, %v942
        %v944 = vsub.f32 1.0, %v943
        %v945 = vmul.f32 %v942, %v944
        %v946 = vadd.f32 %v942, %v945
        %vm947 = vweird.f32 %v896
        %vm948 = vweird.f32 %v942
        %vm949 = vmor %vm947, %vm948
        %v950 = vsel %vm949, %v942, %v946
        %v951 = vand.u32 2147483647, %v896
        %vm952 = vcmp.eq.f32.partialorder %v951, 8.507059e+37
        %v953 = vand.u32 %v896, 2147483648
        %v954 = vor.u32 1.1754944e-38, %v953
        %v955 = vsel %vm952, %v954, %v950
        %v956 = vmul.f32 %v877, %v955
        %v957 = vrcp.pop %v899
        %v958 = vmul.f32 %v899, %v957
        %v959 = vsub.f32 1.0, %v958
        %v960 = vmul.f32 %v957, %v959
        %v961 = vadd.f32 %v957, %v960
        %vm962 = vweird.f32 %v899
        %vm963 = vweird.f32 %v957
        %vm964 = vmor %vm962, %vm963
        %v965 = vsel %vm964, %v957, %v961
        %v966 = vand.u32 2147483647, %v899
        %vm967 = vcmp.eq.f32.partialorder %v966, 8.507059e+37
        %v968 = vand.u32 %v899, 2147483648
        %v969 = vor.u32 1.1754944e-38, %v968
        %v970 = vsel %vm967, %v969, %v965
        %v971 = vmul.f32 %v879, %v970
        %v972 = vrcp.pop %v902
        %v973 = vmul.f32 %v902, %v972
        %v974 = vsub.f32 1.0, %v973
        %v975 = vmul.f32 %v972, %v974
        %v976 = vadd.f32 %v972, %v975
        %vm977 = vweird.f32 %v902
        %vm978 = vweird.f32 %v972
        %vm979 = vmor %vm977, %vm978
        %v980 = vsel %vm979, %v972, %v976
        %v981 = vand.u32 2147483647, %v902
        %vm982 = vcmp.eq.f32.partialorder %v981, 8.507059e+37
        %v983 = vand.u32 %v902, 2147483648
        %v984 = vor.u32 1.1754944e-38, %v983
        %v985 = vsel %vm982, %v984, %v980
        %v986 = vmul.f32 %v881, %v985
        %v987 = vrcp.pop %v905
        %v988 = vmul.f32 %v905, %v987
        %v989 = vsub.f32 1.0, %v988
        %v990 = vmul.f32 %v987, %v989
        %v991 = vadd.f32 %v987, %v990
        %vm992 = vweird.f32 %v905
        %vm993 = vweird.f32 %v987
        %vm994 = vmor %vm992, %vm993
        %v995 = vsel %vm994, %v987, %v991
        %v996 = vand.u32 2147483647, %v905
        %vm997 = vcmp.eq.f32.partialorder %v996, 8.507059e+37
        %v998 = vand.u32 %v905, 2147483648
        %v999 = vor.u32 1.1754944e-38, %v998
        %v1000 = vsel %vm997, %v999, %v995
        %v1001 = vmul.f32 %v883, %v1000
        %v1002 = vrcp.pop %v908
        %v1003 = vmul.f32 %v908, %v1002
        %v1004 = vsub.f32 1.0, %v1003
        %v1005 = vmul.f32 %v1002, %v1004
        %v1006 = vadd.f32 %v1002, %v1005
        %vm1007 = vweird.f32 %v908
        %vm1008 = vweird.f32 %v1002
        %vm1009 = vmor %vm1007, %vm1008
        %v1010 = vsel %vm1009, %v1002, %v1006
        %v1011 = vand.u32 2147483647, %v908
        %vm1012 = vcmp.eq.f32.partialorder %v1011, 8.507059e+37
        %v1013 = vand.u32 %v908, 2147483648
        %v1014 = vor.u32 1.1754944e-38, %v1013
        %v1015 = vsel %vm1012, %v1014, %v1010
        %v1016 = vmul.f32 %v885, %v1015
        %v1017 = vrcp.pop %v911
        %v1018 = vmul.f32 %v911, %v1017
        %v1019 = vsub.f32 1.0, %v1018
        %v1020 = vmul.f32 %v1017, %v1019
        %v1021 = vadd.f32 %v1017, %v1020
        %vm1022 = vweird.f32 %v911
        %vm1023 = vweird.f32 %v1017
        %vm1024 = vmor %vm1022, %vm1023
        %v1025 = vsel %vm1024, %v1017, %v1021
        %v1026 = vand.u32 2147483647, %v911
        %vm1027 = vcmp.eq.f32.partialorder %v1026, 8.507059e+37
        %v1028 = vand.u32 %v911, 2147483648
        %v1029 = vor.u32 1.1754944e-38, %v1028
        %v1030 = vsel %vm1027, %v1029, %v1025
        %v1031 = vmul.f32 %v887, %v1030
        %1032 = vrot.lane.b32.xlu0 %v659, 64
        %v1033 = vpop.permute.xlu0 %1032
        %1034 = vrot.lane.b32.xlu0 %v662, 64
        %v1035 = vpop.permute.xlu0 %1034
        %v1039 = vsel %vm839, %v926, 0
        %v1042 = vsel %vm839, %v941, 0
        %1044 = vmatpush.msra.mxu0 0.0
        %1045 = vmatpush.msra.mxu0 0.0
        %1046 = vmatpush.msra.mxu0 0.0
        %1047 = vmatpush.msra.mxu0 0.0
        %1048 = vmatpush.msra.mxu0 0.0
        %1049 = vmatpush.msra.mxu0 0.0
        %1050 = vmatpush.msra.mxu0 0.0
        %1051 = vmatpush.msra.mxu0 0.0
        %1052 = vmatpush.msra.mxu0 0.0
        %1053 = vmatpush.msra.mxu0 0.0
        %1054 = vmatpush.msra.mxu0 0.0
        %1055 = vmatpush.msra.mxu0 0.0
        %1056 = vmatpush.msra.mxu0 0.0
        %1057 = vmatpush.msra.mxu0 0.0
        %1058 = vmatpush.msra.mxu0 %v1035
        %1059 = vmatpush.msra.mxu0 %v1033
        %1060 = vmatmul.f32.gmra.mxu0 %v1039
        %v1061 = vpop.f32.mrf.mxu0
        %v1062 = vadd.f32 0.0, %v1061
        %1063 = vmatmul.f32.gmra.mxu0 %v1042
        %v1064 = vpop.f32.mrf.mxu0
        %v1065 = vadd.f32 0.0, %v1064
        %1066 = vdwg.mxu0
        %1067 = vrot.lane.b32.xlu0 %v665, 64
        %v1068 = vpop.permute.xlu0 %1067
        %1069 = vrot.lane.b32.xlu0 %v668, 64
        %v1070 = vpop.permute.xlu0 %1069
        %v1074 = vsel %vm839, %v956, 0
        %v1077 = vsel %vm839, %v971, 0
        %1079 = vmatpush.msra.mxu0 0.0
        %1080 = vmatpush.msra.mxu0 0.0
        %1081 = vmatpush.msra.mxu0 0.0
        %1082 = vmatpush.msra.mxu0 0.0
        %1083 = vmatpush.msra.mxu0 0.0
        %1084 = vmatpush.msra.mxu0 0.0
        %1085 = vmatpush.msra.mxu0 0.0
        %1086 = vmatpush.msra.mxu0 0.0
        %1087 = vmatpush.msra.mxu0 0.0
        %1088 = vmatpush.msra.mxu0 0.0
        %1089 = vmatpush.msra.mxu0 0.0
        %1090 = vmatpush.msra.mxu0 0.0
        %1091 = vmatpush.msra.mxu0 0.0
        %1092 = vmatpush.msra.mxu0 0.0
        %1093 = vmatpush.msra.mxu0 %v1070
        %1094 = vmatpush.msra.mxu0 %v1068
        %1095 = vmatmul.f32.gmra.mxu0 %v1074
        %v1096 = vpop.f32.mrf.mxu0
        %v1097 = vadd.f32 0.0, %v1096
        %1098 = vmatmul.f32.gmra.mxu0 %v1077
        %v1099 = vpop.f32.mrf.mxu0
        %v1100 = vadd.f32 0.0, %v1099
        %1101 = vdwg.mxu0
        %1102 = vrot.lane.b32.xlu0 %v671, 64
        %v1103 = vpop.permute.xlu0 %1102
        %1104 = vrot.lane.b32.xlu0 %v674, 64
        %v1105 = vpop.permute.xlu0 %1104
        %v1109 = vsel %vm839, %v986, 0
        %v1112 = vsel %vm839, %v1001, 0
        %1114 = vmatpush.msra.mxu0 0.0
        %1115 = vmatpush.msra.mxu0 0.0
        %1116 = vmatpush.msra.mxu0 0.0
        %1117 = vmatpush.msra.mxu0 0.0
        %1118 = vmatpush.msra.mxu0 0.0
        %1119 = vmatpush.msra.mxu0 0.0
        %1120 = vmatpush.msra.mxu0 0.0
        %1121 = vmatpush.msra.mxu0 0.0
        %1122 = vmatpush.msra.mxu0 0.0
        %1123 = vmatpush.msra.mxu0 0.0
        %1124 = vmatpush.msra.mxu0 0.0
        %1125 = vmatpush.msra.mxu0 0.0
        %1126 = vmatpush.msra.mxu0 0.0
        %1127 = vmatpush.msra.mxu0 0.0
        %1128 = vmatpush.msra.mxu0 %v1105
        %1129 = vmatpush.msra.mxu0 %v1103
        %1130 = vmatmul.f32.gmra.mxu0 %v1109
        %v1131 = vpop.f32.mrf.mxu0
        %v1132 = vadd.f32 0.0, %v1131
        %1133 = vmatmul.f32.gmra.mxu0 %v1112
        %v1134 = vpop.f32.mrf.mxu0
        %v1135 = vadd.f32 0.0, %v1134
        %1136 = vdwg.mxu0
        %1137 = vrot.lane.b32.xlu0 %v677, 64
        %v1138 = vpop.permute.xlu0 %1137
        %1139 = vrot.lane.b32.xlu0 %v680, 64
        %v1140 = vpop.permute.xlu0 %1139
        %v1144 = vsel %vm839, %v1016, 0
        %v1147 = vsel %vm839, %v1031, 0
        %1149 = vmatpush.msra.mxu0 0.0
        %1150 = vmatpush.msra.mxu0 0.0
        %1151 = vmatpush.msra.mxu0 0.0
        %1152 = vmatpush.msra.mxu0 0.0
        %1153 = vmatpush.msra.mxu0 0.0
        %1154 = vmatpush.msra.mxu0 0.0
        %1155 = vmatpush.msra.mxu0 0.0
        %1156 = vmatpush.msra.mxu0 0.0
        %1157 = vmatpush.msra.mxu0 0.0
        %1158 = vmatpush.msra.mxu0 0.0
        %1159 = vmatpush.msra.mxu0 0.0
        %1160 = vmatpush.msra.mxu0 0.0
        %1161 = vmatpush.msra.mxu0 0.0
        %1162 = vmatpush.msra.mxu0 0.0
        %1163 = vmatpush.msra.mxu0 %v1140
        %1164 = vmatpush.msra.mxu0 %v1138
        %1165 = vmatmul.f32.gmra.mxu0 %v1144
        %v1166 = vpop.f32.mrf.mxu0
        %v1167 = vadd.f32 0.0, %v1166
        %1168 = vmatmul.f32.gmra.mxu0 %v1147
        %v1169 = vpop.f32.mrf.mxu0
        %v1170 = vadd.f32 0.0, %v1169
        %1171 = vdwg.mxu0
        %1172 = vrot.lane.b32.xlu0 %v659, 120
        %v1173 = vpop.permute.xlu0 %1172
        %1174 = vrot.lane.b32.xlu0 %v662, 120
        %v1175 = vpop.permute.xlu0 %1174
        %1176 = vrot.lane.b32.xlu0 %v659, 88
        %v1177 = vpop.permute.xlu0 %1176
        %1178 = vrot.lane.b32.xlu0 %v662, 88
        %v1179 = vpop.permute.xlu0 %1178
        %v1180 = vsel %vm696, %v1173, 0
        %v1182 = vsel %vm696, %v1175, 0
        %v1184 = vsel %vm696, %v1177, 0
        %v1186 = vsel %vm696, %v1179, 0
        %1188 = vmatpush.xpose.msra.mxu0 0.0
        %1189 = vmatpush.xpose.msra.mxu0 0.0
        %1190 = vmatpush.xpose.msra.mxu0 0.0
        %1191 = vmatpush.xpose.msra.mxu0 0.0
        %1192 = vmatpush.xpose.msra.mxu0 0.0
        %1193 = vmatpush.xpose.msra.mxu0 0.0
        %1194 = vmatpush.xpose.msra.mxu0 0.0
        %1195 = vmatpush.xpose.msra.mxu0 0.0
        %1196 = vmatpush.xpose.msra.mxu0 0.0
        %1197 = vmatpush.xpose.msra.mxu0 0.0
        %1198 = vmatpush.xpose.msra.mxu0 0.0
        %1199 = vmatpush.xpose.msra.mxu0 0.0
        %1200 = vmatpush.xpose.msra.mxu0 0.0
        %1201 = vmatpush.xpose.msra.mxu0 0.0
        %1202 = vmatpush.xpose.msra.mxu0 %v1186
        %1203 = vmatpush.xpose.msra.mxu0 %v1184
        %1204 = vmatmul.f32.gmra.mxu0 %v1180
        %v1205 = vpop.f32.mrf.mxu0
        %v1206 = vadd.f32 %v684, %v1205
        %1207 = vmatmul.f32.gmra.mxu0 %v1182
        %v1208 = vpop.f32.mrf.mxu0
        %v1209 = vadd.f32 %v685, %v1208
        %1210 = vdwg.mxu0
        %1211 = vrot.lane.b32.xlu0 %v665, 120
        %v1212 = vpop.permute.xlu0 %1211
        %1213 = vrot.lane.b32.xlu0 %v668, 120
        %v1214 = vpop.permute.xlu0 %1213
        %1215 = vrot.lane.b32.xlu0 %v665, 88
        %v1216 = vpop.permute.xlu0 %1215
        %1217 = vrot.lane.b32.xlu0 %v668, 88
        %v1218 = vpop.permute.xlu0 %1217
        %v1219 = vsel %vm696, %v1212, 0
        %v1221 = vsel %vm696, %v1214, 0
        %v1223 = vsel %vm696, %v1216, 0
        %v1225 = vsel %vm696, %v1218, 0
        %1227 = vmatpush.xpose.msra.mxu0 0.0
        %1228 = vmatpush.xpose.msra.mxu0 0.0
        %1229 = vmatpush.xpose.msra.mxu0 0.0
        %1230 = vmatpush.xpose.msra.mxu0 0.0
        %1231 = vmatpush.xpose.msra.mxu0 0.0
        %1232 = vmatpush.xpose.msra.mxu0 0.0
        %1233 = vmatpush.xpose.msra.mxu0 0.0
        %1234 = vmatpush.xpose.msra.mxu0 0.0
        %1235 = vmatpush.xpose.msra.mxu0 0.0
        %1236 = vmatpush.xpose.msra.mxu0 0.0
        %1237 = vmatpush.xpose.msra.mxu0 0.0
        %1238 = vmatpush.xpose.msra.mxu0 0.0
        %1239 = vmatpush.xpose.msra.mxu0 0.0
        %1240 = vmatpush.xpose.msra.mxu0 0.0
        %1241 = vmatpush.xpose.msra.mxu0 %v1225
        %1242 = vmatpush.xpose.msra.mxu0 %v1223
        %1243 = vmatmul.f32.gmra.mxu0 %v1219
        %v1244 = vpop.f32.mrf.mxu0
        %v1245 = vadd.f32 %v684, %v1244
        %1246 = vmatmul.f32.gmra.mxu0 %v1221
        %v1247 = vpop.f32.mrf.mxu0
        %v1248 = vadd.f32 %v685, %v1247
        %1249 = vdwg.mxu0
        %1250 = vrot.lane.b32.xlu0 %v671, 120
        %v1251 = vpop.permute.xlu0 %1250
        %1252 = vrot.lane.b32.xlu0 %v674, 120
        %v1253 = vpop.permute.xlu0 %1252
        %1254 = vrot.lane.b32.xlu0 %v671, 88
        %v1255 = vpop.permute.xlu0 %1254
        %1256 = vrot.lane.b32.xlu0 %v674, 88
        %v1257 = vpop.permute.xlu0 %1256
        %v1258 = vsel %vm696, %v1251, 0
        %v1260 = vsel %vm696, %v1253, 0
        %v1262 = vsel %vm696, %v1255, 0
        %v1264 = vsel %vm696, %v1257, 0
        %1266 = vmatpush.xpose.msra.mxu0 0.0
        %1267 = vmatpush.xpose.msra.mxu0 0.0
        %1268 = vmatpush.xpose.msra.mxu0 0.0
        %1269 = vmatpush.xpose.msra.mxu0 0.0
        %1270 = vmatpush.xpose.msra.mxu0 0.0
        %1271 = vmatpush.xpose.msra.mxu0 0.0
        %1272 = vmatpush.xpose.msra.mxu0 0.0
        %1273 = vmatpush.xpose.msra.mxu0 0.0
        %1274 = vmatpush.xpose.msra.mxu0 0.0
        %1275 = vmatpush.xpose.msra.mxu0 0.0
        %1276 = vmatpush.xpose.msra.mxu0 0.0
        %1277 = vmatpush.xpose.msra.mxu0 0.0
        %1278 = vmatpush.xpose.msra.mxu0 0.0
        %1279 = vmatpush.xpose.msra.mxu0 0.0
        %1280 = vmatpush.xpose.msra.mxu0 %v1264
        %1281 = vmatpush.xpose.msra.mxu0 %v1262
        %1282 = vmatmul.f32.gmra.mxu0 %v1258
        %v1283 = vpop.f32.mrf.mxu0
        %v1284 = vadd.f32 %v684, %v1283
        %1285 = vmatmul.f32.gmra.mxu0 %v1260
        %v1286 = vpop.f32.mrf.mxu0
        %v1287 = vadd.f32 %v685, %v1286
        %1288 = vdwg.mxu0
        %1289 = vrot.lane.b32.xlu0 %v677, 120
        %v1290 = vpop.permute.xlu0 %1289
        %1291 = vrot.lane.b32.xlu0 %v680, 120
        %v1292 = vpop.permute.xlu0 %1291
        %1293 = vrot.lane.b32.xlu0 %v677, 88
        %v1294 = vpop.permute.xlu0 %1293
        %1295 = vrot.lane.b32.xlu0 %v680, 88
        %v1296 = vpop.permute.xlu0 %1295
        %v1297 = vsel %vm696, %v1290, 0
        %v1299 = vsel %vm696, %v1292, 0
        %v1301 = vsel %vm696, %v1294, 0
        %v1303 = vsel %vm696, %v1296, 0
        %1305 = vmatpush.xpose.msra.mxu0 0.0
        %1306 = vmatpush.xpose.msra.mxu0 0.0
        %1307 = vmatpush.xpose.msra.mxu0 0.0
        %1308 = vmatpush.xpose.msra.mxu0 0.0
        %1309 = vmatpush.xpose.msra.mxu0 0.0
        %1310 = vmatpush.xpose.msra.mxu0 0.0
        %1311 = vmatpush.xpose.msra.mxu0 0.0
        %1312 = vmatpush.xpose.msra.mxu0 0.0
        %1313 = vmatpush.xpose.msra.mxu0 0.0
        %1314 = vmatpush.xpose.msra.mxu0 0.0
        %1315 = vmatpush.xpose.msra.mxu0 0.0
        %1316 = vmatpush.xpose.msra.mxu0 0.0
        %1317 = vmatpush.xpose.msra.mxu0 0.0
        %1318 = vmatpush.xpose.msra.mxu0 0.0
        %1319 = vmatpush.xpose.msra.mxu0 %v1303
        %1320 = vmatpush.xpose.msra.mxu0 %v1301
        %1321 = vmatmul.f32.gmra.mxu0 %v1297
        %v1322 = vpop.f32.mrf.mxu0
        %v1323 = vadd.f32 %v684, %v1322
        %1324 = vmatmul.f32.gmra.mxu0 %v1299
        %v1325 = vpop.f32.mrf.mxu0
        %v1326 = vadd.f32 %v685, %v1325
        %1327 = vdwg.mxu0
        %v1328 = vsel %vm839, %v1206, -inf
        %1329 = vmax.xlane.f32.xlu0 %v1328
        %v1330 = vpop.xlane.xlu0 %1329
        %v1331 = vsel %vm839, %v1209, -inf
        %1332 = vmax.xlane.f32.xlu0 %v1331
        %v1333 = vpop.xlane.xlu0 %1332
        %v1334 = vsel %vm839, %v1245, -inf
        %1335 = vmax.xlane.f32.xlu0 %v1334
        %v1336 = vpop.xlane.xlu0 %1335
        %v1337 = vsel %vm839, %v1248, -inf
        %1338 = vmax.xlane.f32.xlu0 %v1337
        %v1339 = vpop.xlane.xlu0 %1338
        %v1340 = vsel %vm839, %v1284, -inf
        %1341 = vmax.xlane.f32.xlu0 %v1340
        %v1342 = vpop.xlane.xlu0 %1341
        %v1343 = vsel %vm839, %v1287, -inf
        %1344 = vmax.xlane.f32.xlu0 %v1343
        %v1345 = vpop.xlane.xlu0 %1344
        %v1346 = vsel %vm839, %v1323, -inf
        %1347 = vmax.xlane.f32.xlu0 %v1346
        %v1348 = vpop.xlane.xlu0 %1347
        %v1349 = vsel %vm839, %v1326, -inf
        %1350 = vmax.xlane.f32.xlu0 %v1349
        %v1351 = vpop.xlane.xlu0 %1350
        %v1352 = vsub.f32 %v1206, %v1330
        %v1353 = vsub.f32 %v1209, %v1333
        %v1354 = vsub.f32 %v1245, %v1336
        %v1355 = vsub.f32 %v1248, %v1339
        %v1356 = vsub.f32 %v1284, %v1342
        %v1357 = vsub.f32 %v1287, %v1345
        %v1358 = vsub.f32 %v1323, %v1348
        %v1359 = vsub.f32 %v1326, %v1351
        %v1360 = vmul.f32 %v1352, 1.442695
        %v1361 = vpow.pop %v1360
        %v1362 = vmul.f32 %v1353, 1.442695
        %v1363 = vpow.pop %v1362
        %v1364 = vmul.f32 %v1354, 1.442695
        %v1365 = vpow.pop %v1364
        %v1366 = vmul.f32 %v1355, 1.442695
        %v1367 = vpow.pop %v1366
        %v1368 = vmul.f32 %v1356, 1.442695
        %v1369 = vpow.pop %v1368
        %v1370 = vmul.f32 %v1357, 1.442695
        %v1371 = vpow.pop %v1370
        %v1372 = vmul.f32 %v1358, 1.442695
        %v1373 = vpow.pop %v1372
        %v1374 = vmul.f32 %v1359, 1.442695
        %v1375 = vpow.pop %v1374
        %v1376 = vsel %vm839, %v1361, 0.0
        %1377 = vadd.xlane.f32.xlu0 %v1376
        %v1378 = vpop.xlane.xlu0 %1377
        %v1379 = vsel %vm839, %v1363, 0.0
        %1380 = vadd.xlane.f32.xlu0 %v1379
        %v1381 = vpop.xlane.xlu0 %1380
        %v1382 = vsel %vm839, %v1365, 0.0
        %1383 = vadd.xlane.f32.xlu0 %v1382
        %v1384 = vpop.xlane.xlu0 %1383
        %v1385 = vsel %vm839, %v1367, 0.0
        %1386 = vadd.xlane.f32.xlu0 %v1385
        %v1387 = vpop.xlane.xlu0 %1386
        %v1388 = vsel %vm839, %v1369, 0.0
        %1389 = vadd.xlane.f32.xlu0 %v1388
        %v1390 = vpop.xlane.xlu0 %1389
        %v1391 = vsel %vm839, %v1371, 0.0
        %1392 = vadd.xlane.f32.xlu0 %v1391
        %v1393 = vpop.xlane.xlu0 %1392
        %v1394 = vsel %vm839, %v1373, 0.0
        %1395 = vadd.xlane.f32.xlu0 %v1394
        %v1396 = vpop.xlane.xlu0 %1395
        %v1397 = vsel %vm839, %v1375, 0.0
        %1398 = vadd.xlane.f32.xlu0 %v1397
        %v1399 = vpop.xlane.xlu0 %1398
        %v1400 = vrcp.pop %v1378
        %v1401 = vmul.f32 %v1378, %v1400
        %v1402 = vsub.f32 1.0, %v1401
        %v1403 = vmul.f32 %v1400, %v1402
        %v1404 = vadd.f32 %v1400, %v1403
        %vm1405 = vweird.f32 %v1378
        %vm1406 = vweird.f32 %v1400
        %vm1407 = vmor %vm1405, %vm1406
        %v1408 = vsel %vm1407, %v1400, %v1404
        %v1409 = vand.u32 2147483647, %v1378
        %vm1410 = vcmp.eq.f32.partialorder %v1409, 8.507059e+37
        %v1411 = vand.u32 %v1378, 2147483648
        %v1412 = vor.u32 1.1754944e-38, %v1411
        %v1413 = vsel %vm1410, %v1412, %v1408
        %v1414 = vmul.f32 %v1361, %v1413
        %v1415 = vrcp.pop %v1381
        %v1416 = vmul.f32 %v1381, %v1415
        %v1417 = vsub.f32 1.0, %v1416
        %v1418 = vmul.f32 %v1415, %v1417
        %v1419 = vadd.f32 %v1415, %v1418
        %vm1420 = vweird.f32 %v1381
        %vm1421 = vweird.f32 %v1415
        %vm1422 = vmor %vm1420, %vm1421
        %v1423 = vsel %vm1422, %v1415, %v1419
        %v1424 = vand.u32 2147483647, %v1381
        %vm1425 = vcmp.eq.f32.partialorder %v1424, 8.507059e+37
        %v1426 = vand.u32 %v1381, 2147483648
        %v1427 = vor.u32 1.1754944e-38, %v1426
        %v1428 = vsel %vm1425, %v1427, %v1423
        %v1429 = vmul.f32 %v1363, %v1428
        %v1430 = vrcp.pop %v1384
        %v1431 = vmul.f32 %v1384, %v1430
        %v1432 = vsub.f32 1.0, %v1431
        %v1433 = vmul.f32 %v1430, %v1432
        %v1434 = vadd.f32 %v1430, %v1433
        %vm1435 = vweird.f32 %v1384
        %vm1436 = vweird.f32 %v1430
        %vm1437 = vmor %vm1435, %vm1436
        %v1438 = vsel %vm1437, %v1430, %v1434
        %v1439 = vand.u32 2147483647, %v1384
        %vm1440 = vcmp.eq.f32.partialorder %v1439, 8.507059e+37
        %v1441 = vand.u32 %v1384, 2147483648
        %v1442 = vor.u32 1.1754944e-38, %v1441
        %v1443 = vsel %vm1440, %v1442, %v1438
        %v1444 = vmul.f32 %v1365, %v1443
        %v1445 = vrcp.pop %v1387
        %v1446 = vmul.f32 %v1387, %v1445
        %v1447 = vsub.f32 1.0, %v1446
        %v1448 = vmul.f32 %v1445, %v1447
        %v1449 = vadd.f32 %v1445, %v1448
        %vm1450 = vweird.f32 %v1387
        %vm1451 = vweird.f32 %v1445
        %vm1452 = vmor %vm1450, %vm1451
        %v1453 = vsel %vm1452, %v1445, %v1449
        %v1454 = vand.u32 2147483647, %v1387
        %vm1455 = vcmp.eq.f32.partialorder %v1454, 8.507059e+37
        %v1456 = vand.u32 %v1387, 2147483648
        %v1457 = vor.u32 1.1754944e-38, %v1456
        %v1458 = vsel %vm1455, %v1457, %v1453
        %v1459 = vmul.f32 %v1367, %v1458
        %v1460 = vrcp.pop %v1390
        %v1461 = vmul.f32 %v1390, %v1460
        %v1462 = vsub.f32 1.0, %v1461
        %v1463 = vmul.f32 %v1460, %v1462
        %v1464 = vadd.f32 %v1460, %v1463
        %vm1465 = vweird.f32 %v1390
        %vm1466 = vweird.f32 %v1460
        %vm1467 = vmor %vm1465, %vm1466
        %v1468 = vsel %vm1467, %v1460, %v1464
        %v1469 = vand.u32 2147483647, %v1390
        %vm1470 = vcmp.eq.f32.partialorder %v1469, 8.507059e+37
        %v1471 = vand.u32 %v1390, 2147483648
        %v1472 = vor.u32 1.1754944e-38, %v1471
        %v1473 = vsel %vm1470, %v1472, %v1468
        %v1474 = vmul.f32 %v1369, %v1473
        %v1475 = vrcp.pop %v1393
        %v1476 = vmul.f32 %v1393, %v1475
        %v1477 = vsub.f32 1.0, %v1476
        %v1478 = vmul.f32 %v1475, %v1477
        %v1479 = vadd.f32 %v1475, %v1478
        %vm1480 = vweird.f32 %v1393
        %vm1481 = vweird.f32 %v1475
        %vm1482 = vmor %vm1480, %vm1481
        %v1483 = vsel %vm1482, %v1475, %v1479
        %v1484 = vand.u32 2147483647, %v1393
        %vm1485 = vcmp.eq.f32.partialorder %v1484, 8.507059e+37
        %v1486 = vand.u32 %v1393, 2147483648
        %v1487 = vor.u32 1.1754944e-38, %v1486
        %v1488 = vsel %vm1485, %v1487, %v1483
        %v1489 = vmul.f32 %v1371, %v1488
        %v1490 = vrcp.pop %v1396
        %v1491 = vmul.f32 %v1396, %v1490
        %v1492 = vsub.f32 1.0, %v1491
        %v1493 = vmul.f32 %v1490, %v1492
        %v1494 = vadd.f32 %v1490, %v1493
        %vm1495 = vweird.f32 %v1396
        %vm1496 = vweird.f32 %v1490
        %vm1497 = vmor %vm1495, %vm1496
        %v1498 = vsel %vm1497, %v1490, %v1494
        %v1499 = vand.u32 2147483647, %v1396
        %vm1500 = vcmp.eq.f32.partialorder %v1499, 8.507059e+37
        %v1501 = vand.u32 %v1396, 2147483648
        %v1502 = vor.u32 1.1754944e-38, %v1501
        %v1503 = vsel %vm1500, %v1502, %v1498
        %v1504 = vmul.f32 %v1373, %v1503
        %v1505 = vrcp.pop %v1399
        %v1506 = vmul.f32 %v1399, %v1505
        %v1507 = vsub.f32 1.0, %v1506
        %v1508 = vmul.f32 %v1505, %v1507
        %v1509 = vadd.f32 %v1505, %v1508
        %vm1510 = vweird.f32 %v1399
        %vm1511 = vweird.f32 %v1505
        %vm1512 = vmor %vm1510, %vm1511
        %v1513 = vsel %vm1512, %v1505, %v1509
        %v1514 = vand.u32 2147483647, %v1399
        %vm1515 = vcmp.eq.f32.partialorder %v1514, 8.507059e+37
        %v1516 = vand.u32 %v1399, 2147483648
        %v1517 = vor.u32 1.1754944e-38, %v1516
        %v1518 = vsel %vm1515, %v1517, %v1513
        %v1519 = vmul.f32 %v1375, %v1518
        %1520 = vrot.lane.b32.xlu0 %v659, 56
        %v1521 = vpop.permute.xlu0 %1520
        %1522 = vrot.lane.b32.xlu0 %v662, 56
        %v1523 = vpop.permute.xlu0 %1522
        %v1527 = vsel %vm839, %v1414, 0
        %v1530 = vsel %vm839, %v1429, 0
        %1532 = vmatpush.msra.mxu0 0.0
        %1533 = vmatpush.msra.mxu0 0.0
        %1534 = vmatpush.msra.mxu0 0.0
        %1535 = vmatpush.msra.mxu0 0.0
        %1536 = vmatpush.msra.mxu0 0.0
        %1537 = vmatpush.msra.mxu0 0.0
        %1538 = vmatpush.msra.mxu0 0.0
        %1539 = vmatpush.msra.mxu0 0.0
        %1540 = vmatpush.msra.mxu0 0.0
        %1541 = vmatpush.msra.mxu0 0.0
        %1542 = vmatpush.msra.mxu0 0.0
        %1543 = vmatpush.msra.mxu0 0.0
        %1544 = vmatpush.msra.mxu0 0.0
        %1545 = vmatpush.msra.mxu0 0.0
        %1546 = vmatpush.msra.mxu0 %v1523
        %1547 = vmatpush.msra.mxu0 %v1521
        %1548 = vmatmul.f32.gmra.mxu0 %v1527
        %v1549 = vpop.f32.mrf.mxu0
        %v1550 = vadd.f32 0.0, %v1549
        %1551 = vmatmul.f32.gmra.mxu0 %v1530
        %v1552 = vpop.f32.mrf.mxu0
        %v1553 = vadd.f32 0.0, %v1552
        %1554 = vdwg.mxu0
        %1555 = vrot.lane.b32.xlu0 %v665, 56
        %v1556 = vpop.permute.xlu0 %1555
        %1557 = vrot.lane.b32.xlu0 %v668, 56
        %v1558 = vpop.permute.xlu0 %1557
        %v1562 = vsel %vm839, %v1444, 0
        %v1565 = vsel %vm839, %v1459, 0
        %1567 = vmatpush.msra.mxu0 0.0
        %1568 = vmatpush.msra.mxu0 0.0
        %1569 = vmatpush.msra.mxu0 0.0
        %1570 = vmatpush.msra.mxu0 0.0
        %1571 = vmatpush.msra.mxu0 0.0
        %1572 = vmatpush.msra.mxu0 0.0
        %1573 = vmatpush.msra.mxu0 0.0
        %1574 = vmatpush.msra.mxu0 0.0
        %1575 = vmatpush.msra.mxu0 0.0
        %1576 = vmatpush.msra.mxu0 0.0
        %1577 = vmatpush.msra.mxu0 0.0
        %1578 = vmatpush.msra.mxu0 0.0
        %1579 = vmatpush.msra.mxu0 0.0
        %1580 = vmatpush.msra.mxu0 0.0
        %1581 = vmatpush.msra.mxu0 %v1558
        %1582 = vmatpush.msra.mxu0 %v1556
        %1583 = vmatmul.f32.gmra.mxu0 %v1562
        %v1584 = vpop.f32.mrf.mxu0
        %v1585 = vadd.f32 0.0, %v1584
        %1586 = vmatmul.f32.gmra.mxu0 %v1565
        %v1587 = vpop.f32.mrf.mxu0
        %v1588 = vadd.f32 0.0, %v1587
        %1589 = vdwg.mxu0
        %1590 = vrot.lane.b32.xlu0 %v671, 56
        %v1591 = vpop.permute.xlu0 %1590
        %1592 = vrot.lane.b32.xlu0 %v674, 56
        %v1593 = vpop.permute.xlu0 %1592
        %v1597 = vsel %vm839, %v1474, 0
        %v1600 = vsel %vm839, %v1489, 0
        %1602 = vmatpush.msra.mxu0 0.0
        %1603 = vmatpush.msra.mxu0 0.0
        %1604 = vmatpush.msra.mxu0 0.0
        %1605 = vmatpush.msra.mxu0 0.0
        %1606 = vmatpush.msra.mxu0 0.0
        %1607 = vmatpush.msra.mxu0 0.0
        %1608 = vmatpush.msra.mxu0 0.0
        %1609 = vmatpush.msra.mxu0 0.0
        %1610 = vmatpush.msra.mxu0 0.0
        %1611 = vmatpush.msra.mxu0 0.0
        %1612 = vmatpush.msra.mxu0 0.0
        %1613 = vmatpush.msra.mxu0 0.0
        %1614 = vmatpush.msra.mxu0 0.0
        %1615 = vmatpush.msra.mxu0 0.0
        %1616 = vmatpush.msra.mxu0 %v1593
        %1617 = vmatpush.msra.mxu0 %v1591
        %1618 = vmatmul.f32.gmra.mxu0 %v1597
        %v1619 = vpop.f32.mrf.mxu0
        %v1620 = vadd.f32 0.0, %v1619
        %1621 = vmatmul.f32.gmra.mxu0 %v1600
        %v1622 = vpop.f32.mrf.mxu0
        %v1623 = vadd.f32 0.0, %v1622
        %1624 = vdwg.mxu0
        %1625 = vrot.lane.b32.xlu0 %v677, 56
        %v1626 = vpop.permute.xlu0 %1625
        %1627 = vrot.lane.b32.xlu0 %v680, 56
        %v1628 = vpop.permute.xlu0 %1627
        %v1632 = vsel %vm839, %v1504, 0
        %v1635 = vsel %vm839, %v1519, 0
        %1637 = vmatpush.msra.mxu0 0.0
        %1638 = vmatpush.msra.mxu0 0.0
        %1639 = vmatpush.msra.mxu0 0.0
        %1640 = vmatpush.msra.mxu0 0.0
        %1641 = vmatpush.msra.mxu0 0.0
        %1642 = vmatpush.msra.mxu0 0.0
        %1643 = vmatpush.msra.mxu0 0.0
        %1644 = vmatpush.msra.mxu0 0.0
        %1645 = vmatpush.msra.mxu0 0.0
        %1646 = vmatpush.msra.mxu0 0.0
        %1647 = vmatpush.msra.mxu0 0.0
        %1648 = vmatpush.msra.mxu0 0.0
        %1649 = vmatpush.msra.mxu0 0.0
        %1650 = vmatpush.msra.mxu0 0.0
        %1651 = vmatpush.msra.mxu0 %v1628
        %1652 = vmatpush.msra.mxu0 %v1626
        %1653 = vmatmul.f32.gmra.mxu0 %v1632
        %v1654 = vpop.f32.mrf.mxu0
        %v1655 = vadd.f32 0.0, %v1654
        %1656 = vmatmul.f32.gmra.mxu0 %v1635
        %v1657 = vpop.f32.mrf.mxu0
        %v1658 = vadd.f32 0.0, %v1657
        %1659 = vdwg.mxu0
        %1660 = vrot.lane.b32.xlu0 %v659, 112
        %v1661 = vpop.permute.xlu0 %1660
        %1662 = vrot.lane.b32.xlu0 %v662, 112
        %v1663 = vpop.permute.xlu0 %1662
        %1664 = vrot.lane.b32.xlu0 %v659, 80
        %v1665 = vpop.permute.xlu0 %1664
        %1666 = vrot.lane.b32.xlu0 %v662, 80
        %v1667 = vpop.permute.xlu0 %1666
        %v1668 = vsel %vm696, %v1661, 0
        %v1670 = vsel %vm696, %v1663, 0
        %v1672 = vsel %vm696, %v1665, 0
        %v1674 = vsel %vm696, %v1667, 0
        %1676 = vmatpush.xpose.msra.mxu0 0.0
        %1677 = vmatpush.xpose.msra.mxu0 0.0
        %1678 = vmatpush.xpose.msra.mxu0 0.0
        %1679 = vmatpush.xpose.msra.mxu0 0.0
        %1680 = vmatpush.xpose.msra.mxu0 0.0
        %1681 = vmatpush.xpose.msra.mxu0 0.0
        %1682 = vmatpush.xpose.msra.mxu0 0.0
        %1683 = vmatpush.xpose.msra.mxu0 0.0
        %1684 = vmatpush.xpose.msra.mxu0 0.0
        %1685 = vmatpush.xpose.msra.mxu0 0.0
        %1686 = vmatpush.xpose.msra.mxu0 0.0
        %1687 = vmatpush.xpose.msra.mxu0 0.0
        %1688 = vmatpush.xpose.msra.mxu0 0.0
        %1689 = vmatpush.xpose.msra.mxu0 0.0
        %1690 = vmatpush.xpose.msra.mxu0 %v1674
        %1691 = vmatpush.xpose.msra.mxu0 %v1672
        %1692 = vmatmul.f32.gmra.mxu0 %v1668
        %v1693 = vpop.f32.mrf.mxu0
        %v1694 = vadd.f32 %v686, %v1693
        %1695 = vmatmul.f32.gmra.mxu0 %v1670
        %v1696 = vpop.f32.mrf.mxu0
        %v1697 = vadd.f32 %v687, %v1696
        %1698 = vdwg.mxu0
        %1699 = vrot.lane.b32.xlu0 %v665, 112
        %v1700 = vpop.permute.xlu0 %1699
        %1701 = vrot.lane.b32.xlu0 %v668, 112
        %v1702 = vpop.permute.xlu0 %1701
        %1703 = vrot.lane.b32.xlu0 %v665, 80
        %v1704 = vpop.permute.xlu0 %1703
        %1705 = vrot.lane.b32.xlu0 %v668, 80
        %v1706 = vpop.permute.xlu0 %1705
        %v1707 = vsel %vm696, %v1700, 0
        %v1709 = vsel %vm696, %v1702, 0
        %v1711 = vsel %vm696, %v1704, 0
        %v1713 = vsel %vm696, %v1706, 0
        %1715 = vmatpush.xpose.msra.mxu0 0.0
        %1716 = vmatpush.xpose.msra.mxu0 0.0
        %1717 = vmatpush.xpose.msra.mxu0 0.0
        %1718 = vmatpush.xpose.msra.mxu0 0.0
        %1719 = vmatpush.xpose.msra.mxu0 0.0
        %1720 = vmatpush.xpose.msra.mxu0 0.0
        %1721 = vmatpush.xpose.msra.mxu0 0.0
        %1722 = vmatpush.xpose.msra.mxu0 0.0
        %1723 = vmatpush.xpose.msra.mxu0 0.0
        %1724 = vmatpush.xpose.msra.mxu0 0.0
        %1725 = vmatpush.xpose.msra.mxu0 0.0
        %1726 = vmatpush.xpose.msra.mxu0 0.0
        %1727 = vmatpush.xpose.msra.mxu0 0.0
        %1728 = vmatpush.xpose.msra.mxu0 0.0
        %1729 = vmatpush.xpose.msra.mxu0 %v1713
        %1730 = vmatpush.xpose.msra.mxu0 %v1711
        %1731 = vmatmul.f32.gmra.mxu0 %v1707
        %v1732 = vpop.f32.mrf.mxu0
        %v1733 = vadd.f32 %v686, %v1732
        %1734 = vmatmul.f32.gmra.mxu0 %v1709
        %v1735 = vpop.f32.mrf.mxu0
        %v1736 = vadd.f32 %v687, %v1735
        %1737 = vdwg.mxu0
        %1738 = vrot.lane.b32.xlu0 %v671, 112
        %v1739 = vpop.permute.xlu0 %1738
        %1740 = vrot.lane.b32.xlu0 %v674, 112
        %v1741 = vpop.permute.xlu0 %1740
        %1742 = vrot.lane.b32.xlu0 %v671, 80
        %v1743 = vpop.permute.xlu0 %1742
        %1744 = vrot.lane.b32.xlu0 %v674, 80
        %v1745 = vpop.permute.xlu0 %1744
        %v1746 = vsel %vm696, %v1739, 0
        %v1748 = vsel %vm696, %v1741, 0
        %v1750 = vsel %vm696, %v1743, 0
        %v1752 = vsel %vm696, %v1745, 0
        %1754 = vmatpush.xpose.msra.mxu0 0.0
        %1755 = vmatpush.xpose.msra.mxu0 0.0
        %1756 = vmatpush.xpose.msra.mxu0 0.0
        %1757 = vmatpush.xpose.msra.mxu0 0.0
        %1758 = vmatpush.xpose.msra.mxu0 0.0
        %1759 = vmatpush.xpose.msra.mxu0 0.0
        %1760 = vmatpush.xpose.msra.mxu0 0.0
        %1761 = vmatpush.xpose.msra.mxu0 0.0
        %1762 = vmatpush.xpose.msra.mxu0 0.0
        %1763 = vmatpush.xpose.msra.mxu0 0.0
        %1764 = vmatpush.xpose.msra.mxu0 0.0
        %1765 = vmatpush.xpose.msra.mxu0 0.0
        %1766 = vmatpush.xpose.msra.mxu0 0.0
        %1767 = vmatpush.xpose.msra.mxu0 0.0
        %1768 = vmatpush.xpose.msra.mxu0 %v1752
        %1769 = vmatpush.xpose.msra.mxu0 %v1750
        %1770 = vmatmul.f32.gmra.mxu0 %v1746
        %v1771 = vpop.f32.mrf.mxu0
        %v1772 = vadd.f32 %v686, %v1771
        %1773 = vmatmul.f32.gmra.mxu0 %v1748
        %v1774 = vpop.f32.mrf.mxu0
        %v1775 = vadd.f32 %v687, %v1774
        %1776 = vdwg.mxu0
        %1777 = vrot.lane.b32.xlu0 %v677, 112
        %v1778 = vpop.permute.xlu0 %1777
        %1779 = vrot.lane.b32.xlu0 %v680, 112
        %v1780 = vpop.permute.xlu0 %1779
        %1781 = vrot.lane.b32.xlu0 %v677, 80
        %v1782 = vpop.permute.xlu0 %1781
        %1783 = vrot.lane.b32.xlu0 %v680, 80
        %v1784 = vpop.permute.xlu0 %1783
        %v1785 = vsel %vm696, %v1778, 0
        %v1787 = vsel %vm696, %v1780, 0
        %v1789 = vsel %vm696, %v1782, 0
        %v1791 = vsel %vm696, %v1784, 0
        %1793 = vmatpush.xpose.msra.mxu0 0.0
        %1794 = vmatpush.xpose.msra.mxu0 0.0
        %1795 = vmatpush.xpose.msra.mxu0 0.0
        %1796 = vmatpush.xpose.msra.mxu0 0.0
        %1797 = vmatpush.xpose.msra.mxu0 0.0
        %1798 = vmatpush.xpose.msra.mxu0 0.0
        %1799 = vmatpush.xpose.msra.mxu0 0.0
        %1800 = vmatpush.xpose.msra.mxu0 0.0
        %1801 = vmatpush.xpose.msra.mxu0 0.0
        %1802 = vmatpush.xpose.msra.mxu0 0.0
        %1803 = vmatpush.xpose.msra.mxu0 0.0
        %1804 = vmatpush.xpose.msra.mxu0 0.0
        %1805 = vmatpush.xpose.msra.mxu0 0.0
        %1806 = vmatpush.xpose.msra.mxu0 0.0
        %1807 = vmatpush.xpose.msra.mxu0 %v1791
        %1808 = vmatpush.xpose.msra.mxu0 %v1789
        %1809 = vmatmul.f32.gmra.mxu0 %v1785
        %v1810 = vpop.f32.mrf.mxu0
        %v1811 = vadd.f32 %v686, %v1810
        %1812 = vmatmul.f32.gmra.mxu0 %v1787
        %v1813 = vpop.f32.mrf.mxu0
        %v1814 = vadd.f32 %v687, %v1813
        %1815 = vdwg.mxu0
        %v1816 = vsel %vm839, %v1694, -inf
        %1817 = vmax.xlane.f32.xlu0 %v1816
        %v1818 = vpop.xlane.xlu0 %1817
        %v1819 = vsel %vm839, %v1697, -inf
        %1820 = vmax.xlane.f32.xlu0 %v1819
        %v1821 = vpop.xlane.xlu0 %1820
        %v1822 = vsel %vm839, %v1733, -inf
        %1823 = vmax.xlane.f32.xlu0 %v1822
        %v1824 = vpop.xlane.xlu0 %1823
        %v1825 = vsel %vm839, %v1736, -inf
        %1826 = vmax.xlane.f32.xlu0 %v1825
        %v1827 = vpop.xlane.xlu0 %1826
        %v1828 = vsel %vm839, %v1772, -inf
        %1829 = vmax.xlane.f32.xlu0 %v1828
        %v1830 = vpop.xlane.xlu0 %1829
        %v1831 = vsel %vm839, %v1775, -inf
        %1832 = vmax.xlane.f32.xlu0 %v1831
        %v1833 = vpop.xlane.xlu0 %1832
        %v1834 = vsel %vm839, %v1811, -inf
        %1835 = vmax.xlane.f32.xlu0 %v1834
        %v1836 = vpop.xlane.xlu0 %1835
        %v1837 = vsel %vm839, %v1814, -inf
        %1838 = vmax.xlane.f32.xlu0 %v1837
        %v1839 = vpop.xlane.xlu0 %1838
        %v1840 = vsub.f32 %v1694, %v1818
        %v1841 = vsub.f32 %v1697, %v1821
        %v1842 = vsub.f32 %v1733, %v1824
        %v1843 = vsub.f32 %v1736, %v1827
        %v1844 = vsub.f32 %v1772, %v1830
        %v1845 = vsub.f32 %v1775, %v1833
        %v1846 = vsub.f32 %v1811, %v1836
        %v1847 = vsub.f32 %v1814, %v1839
        %v1848 = vmul.f32 %v1840, 1.442695
        %v1849 = vpow.pop %v1848
        %v1850 = vmul.f32 %v1841, 1.442695
        %v1851 = vpow.pop %v1850
        %v1852 = vmul.f32 %v1842, 1.442695
        %v1853 = vpow.pop %v1852
        %v1854 = vmul.f32 %v1843, 1.442695
        %v1855 = vpow.pop %v1854
        %v1856 = vmul.f32 %v1844, 1.442695
        %v1857 = vpow.pop %v1856
        %v1858 = vmul.f32 %v1845, 1.442695
        %v1859 = vpow.pop %v1858
        %v1860 = vmul.f32 %v1846, 1.442695
        %v1861 = vpow.pop %v1860
        %v1862 = vmul.f32 %v1847, 1.442695
        %v1863 = vpow.pop %v1862
        %v1864 = vsel %vm839, %v1849, 0.0
        %1865 = vadd.xlane.f32.xlu0 %v1864
        %v1866 = vpop.xlane.xlu0 %1865
        %v1867 = vsel %vm839, %v1851, 0.0
        %1868 = vadd.xlane.f32.xlu0 %v1867
        %v1869 = vpop.xlane.xlu0 %1868
        %v1870 = vsel %vm839, %v1853, 0.0
        %1871 = vadd.xlane.f32.xlu0 %v1870
        %v1872 = vpop.xlane.xlu0 %1871
        %v1873 = vsel %vm839, %v1855, 0.0
        %1874 = vadd.xlane.f32.xlu0 %v1873
        %v1875 = vpop.xlane.xlu0 %1874
        %v1876 = vsel %vm839, %v1857, 0.0
        %1877 = vadd.xlane.f32.xlu0 %v1876
        %v1878 = vpop.xlane.xlu0 %1877
        %v1879 = vsel %vm839, %v1859, 0.0
        %1880 = vadd.xlane.f32.xlu0 %v1879
        %v1881 = vpop.xlane.xlu0 %1880
        %v1882 = vsel %vm839, %v1861, 0.0
        %1883 = vadd.xlane.f32.xlu0 %v1882
        %v1884 = vpop.xlane.xlu0 %1883
        %v1885 = vsel %vm839, %v1863, 0.0
        %1886 = vadd.xlane.f32.xlu0 %v1885
        %v1887 = vpop.xlane.xlu0 %1886
        %v1888 = vrcp.pop %v1866
        %v1889 = vmul.f32 %v1866, %v1888
        %v1890 = vsub.f32 1.0, %v1889
        %v1891 = vmul.f32 %v1888, %v1890
        %v1892 = vadd.f32 %v1888, %v1891
        %vm1893 = vweird.f32 %v1866
        %vm1894 = vweird.f32 %v1888
        %vm1895 = vmor %vm1893, %vm1894
        %v1896 = vsel %vm1895, %v1888, %v1892
        %v1897 = vand.u32 2147483647, %v1866
        %vm1898 = vcmp.eq.f32.partialorder %v1897, 8.507059e+37
        %v1899 = vand.u32 %v1866, 2147483648
        %v1900 = vor.u32 1.1754944e-38, %v1899
        %v1901 = vsel %vm1898, %v1900, %v1896
        %v1902 = vmul.f32 %v1849, %v1901
        %v1903 = vrcp.pop %v1869
        %v1904 = vmul.f32 %v1869, %v1903
        %v1905 = vsub.f32 1.0, %v1904
        %v1906 = vmul.f32 %v1903, %v1905
        %v1907 = vadd.f32 %v1903, %v1906
        %vm1908 = vweird.f32 %v1869
        %vm1909 = vweird.f32 %v1903
        %vm1910 = vmor %vm1908, %vm1909
        %v1911 = vsel %vm1910, %v1903, %v1907
        %v1912 = vand.u32 2147483647, %v1869
        %vm1913 = vcmp.eq.f32.partialorder %v1912, 8.507059e+37
        %v1914 = vand.u32 %v1869, 2147483648
        %v1915 = vor.u32 1.1754944e-38, %v1914
        %v1916 = vsel %vm1913, %v1915, %v1911
        %v1917 = vmul.f32 %v1851, %v1916
        %v1918 = vrcp.pop %v1872
        %v1919 = vmul.f32 %v1872, %v1918
        %v1920 = vsub.f32 1.0, %v1919
        %v1921 = vmul.f32 %v1918, %v1920
        %v1922 = vadd.f32 %v1918, %v1921
        %vm1923 = vweird.f32 %v1872
        %vm1924 = vweird.f32 %v1918
        %vm1925 = vmor %vm1923, %vm1924
        %v1926 = vsel %vm1925, %v1918, %v1922
        %v1927 = vand.u32 2147483647, %v1872
        %vm1928 = vcmp.eq.f32.partialorder %v1927, 8.507059e+37
        %v1929 = vand.u32 %v1872, 2147483648
        %v1930 = vor.u32 1.1754944e-38, %v1929
        %v1931 = vsel %vm1928, %v1930, %v1926
        %v1932 = vmul.f32 %v1853, %v1931
        %v1933 = vrcp.pop %v1875
        %v1934 = vmul.f32 %v1875, %v1933
        %v1935 = vsub.f32 1.0, %v1934
        %v1936 = vmul.f32 %v1933, %v1935
        %v1937 = vadd.f32 %v1933, %v1936
        %vm1938 = vweird.f32 %v1875
        %vm1939 = vweird.f32 %v1933
        %vm1940 = vmor %vm1938, %vm1939
        %v1941 = vsel %vm1940, %v1933, %v1937
        %v1942 = vand.u32 2147483647, %v1875
        %vm1943 = vcmp.eq.f32.partialorder %v1942, 8.507059e+37
        %v1944 = vand.u32 %v1875, 2147483648
        %v1945 = vor.u32 1.1754944e-38, %v1944
        %v1946 = vsel %vm1943, %v1945, %v1941
        %v1947 = vmul.f32 %v1855, %v1946
        %v1948 = vrcp.pop %v1878
        %v1949 = vmul.f32 %v1878, %v1948
        %v1950 = vsub.f32 1.0, %v1949
        %v1951 = vmul.f32 %v1948, %v1950
        %v1952 = vadd.f32 %v1948, %v1951
        %vm1953 = vweird.f32 %v1878
        %vm1954 = vweird.f32 %v1948
        %vm1955 = vmor %vm1953, %vm1954
        %v1956 = vsel %vm1955, %v1948, %v1952
        %v1957 = vand.u32 2147483647, %v1878
        %vm1958 = vcmp.eq.f32.partialorder %v1957, 8.507059e+37
        %v1959 = vand.u32 %v1878, 2147483648
        %v1960 = vor.u32 1.1754944e-38, %v1959
        %v1961 = vsel %vm1958, %v1960, %v1956
        %v1962 = vmul.f32 %v1857, %v1961
        %v1963 = vrcp.pop %v1881
        %v1964 = vmul.f32 %v1881, %v1963
        %v1965 = vsub.f32 1.0, %v1964
        %v1966 = vmul.f32 %v1963, %v1965
        %v1967 = vadd.f32 %v1963, %v1966
        %vm1968 = vweird.f32 %v1881
        %vm1969 = vweird.f32 %v1963
        %vm1970 = vmor %vm1968, %vm1969
        %v1971 = vsel %vm1970, %v1963, %v1967
        %v1972 = vand.u32 2147483647, %v1881
        %vm1973 = vcmp.eq.f32.partialorder %v1972, 8.507059e+37
        %v1974 = vand.u32 %v1881, 2147483648
        %v1975 = vor.u32 1.1754944e-38, %v1974
        %v1976 = vsel %vm1973, %v1975, %v1971
        %v1977 = vmul.f32 %v1859, %v1976
        %v1978 = vrcp.pop %v1884
        %v1979 = vmul.f32 %v1884, %v1978
        %v1980 = vsub.f32 1.0, %v1979
        %v1981 = vmul.f32 %v1978, %v1980
        %v1982 = vadd.f32 %v1978, %v1981
        %vm1983 = vweird.f32 %v1884
        %vm1984 = vweird.f32 %v1978
        %vm1985 = vmor %vm1983, %vm1984
        %v1986 = vsel %vm1985, %v1978, %v1982
        %v1987 = vand.u32 2147483647, %v1884
        %vm1988 = vcmp.eq.f32.partialorder %v1987, 8.507059e+37
        %v1989 = vand.u32 %v1884, 2147483648
        %v1990 = vor.u32 1.1754944e-38, %v1989
        %v1991 = vsel %vm1988, %v1990, %v1986
        %v1992 = vmul.f32 %v1861, %v1991
        %v1993 = vrcp.pop %v1887
        %v1994 = vmul.f32 %v1887, %v1993
        %v1995 = vsub.f32 1.0, %v1994
        %v1996 = vmul.f32 %v1993, %v1995
        %v1997 = vadd.f32 %v1993, %v1996
        %vm1998 = vweird.f32 %v1887
        %vm1999 = vweird.f32 %v1993
        %vm2000 = vmor %vm1998, %vm1999
        %v2001 = vsel %vm2000, %v1993, %v1997
        %v2002 = vand.u32 2147483647, %v1887
        %vm2003 = vcmp.eq.f32.partialorder %v2002, 8.507059e+37
        %v2004 = vand.u32 %v1887, 2147483648
        %v2005 = vor.u32 1.1754944e-38, %v2004
        %v2006 = vsel %vm2003, %v2005, %v2001
        %v2007 = vmul.f32 %v1863, %v2006
        %2008 = vrot.lane.b32.xlu0 %v659, 48
        %v2009 = vpop.permute.xlu0 %2008
        %2010 = vrot.lane.b32.xlu0 %v662, 48
        %v2011 = vpop.permute.xlu0 %2010
        %v2015 = vsel %vm839, %v1902, 0
        %v2018 = vsel %vm839, %v1917, 0
        %2020 = vmatpush.msra.mxu0 0.0
        %2021 = vmatpush.msra.mxu0 0.0
        %2022 = vmatpush.msra.mxu0 0.0
        %2023 = vmatpush.msra.mxu0 0.0
        %2024 = vmatpush.msra.mxu0 0.0
        %2025 = vmatpush.msra.mxu0 0.0
        %2026 = vmatpush.msra.mxu0 0.0
        %2027 = vmatpush.msra.mxu0 0.0
        %2028 = vmatpush.msra.mxu0 0.0
        %2029 = vmatpush.msra.mxu0 0.0
        %2030 = vmatpush.msra.mxu0 0.0
        %2031 = vmatpush.msra.mxu0 0.0
        %2032 = vmatpush.msra.mxu0 0.0
        %2033 = vmatpush.msra.mxu0 0.0
        %2034 = vmatpush.msra.mxu0 %v2011
        %2035 = vmatpush.msra.mxu0 %v2009
        %2036 = vmatmul.f32.gmra.mxu0 %v2015
        %v2037 = vpop.f32.mrf.mxu0
        %v2038 = vadd.f32 0.0, %v2037
        %2039 = vmatmul.f32.gmra.mxu0 %v2018
        %v2040 = vpop.f32.mrf.mxu0
        %v2041 = vadd.f32 0.0, %v2040
        %2042 = vdwg.mxu0
        %2043 = vrot.lane.b32.xlu0 %v665, 48
        %v2044 = vpop.permute.xlu0 %2043
        %2045 = vrot.lane.b32.xlu0 %v668, 48
        %v2046 = vpop.permute.xlu0 %2045
        %v2050 = vsel %vm839, %v1932, 0
        %v2053 = vsel %vm839, %v1947, 0
        %2055 = vmatpush.msra.mxu0 0.0
        %2056 = vmatpush.msra.mxu0 0.0
        %2057 = vmatpush.msra.mxu0 0.0
        %2058 = vmatpush.msra.mxu0 0.0
        %2059 = vmatpush.msra.mxu0 0.0
        %2060 = vmatpush.msra.mxu0 0.0
        %2061 = vmatpush.msra.mxu0 0.0
        %2062 = vmatpush.msra.mxu0 0.0
        %2063 = vmatpush.msra.mxu0 0.0
        %2064 = vmatpush.msra.mxu0 0.0
        %2065 = vmatpush.msra.mxu0 0.0
        %2066 = vmatpush.msra.mxu0 0.0
        %2067 = vmatpush.msra.mxu0 0.0
        %2068 = vmatpush.msra.mxu0 0.0
        %2069 = vmatpush.msra.mxu0 %v2046
        %2070 = vmatpush.msra.mxu0 %v2044
        %2071 = vmatmul.f32.gmra.mxu0 %v2050
        %v2072 = vpop.f32.mrf.mxu0
        %v2073 = vadd.f32 0.0, %v2072
        %2074 = vmatmul.f32.gmra.mxu0 %v2053
        %v2075 = vpop.f32.mrf.mxu0
        %v2076 = vadd.f32 0.0, %v2075
        %2077 = vdwg.mxu0
        %2078 = vrot.lane.b32.xlu0 %v671, 48
        %v2079 = vpop.permute.xlu0 %2078
        %2080 = vrot.lane.b32.xlu0 %v674, 48
        %v2081 = vpop.permute.xlu0 %2080
        %v2085 = vsel %vm839, %v1962, 0
        %v2088 = vsel %vm839, %v1977, 0
        %2090 = vmatpush.msra.mxu0 0.0
        %2091 = vmatpush.msra.mxu0 0.0
        %2092 = vmatpush.msra.mxu0 0.0
        %2093 = vmatpush.msra.mxu0 0.0
        %2094 = vmatpush.msra.mxu0 0.0
        %2095 = vmatpush.msra.mxu0 0.0
        %2096 = vmatpush.msra.mxu0 0.0
        %2097 = vmatpush.msra.mxu0 0.0
        %2098 = vmatpush.msra.mxu0 0.0
        %2099 = vmatpush.msra.mxu0 0.0
        %2100 = vmatpush.msra.mxu0 0.0
        %2101 = vmatpush.msra.mxu0 0.0
        %2102 = vmatpush.msra.mxu0 0.0
        %2103 = vmatpush.msra.mxu0 0.0
        %2104 = vmatpush.msra.mxu0 %v2081
        %2105 = vmatpush.msra.mxu0 %v2079
        %2106 = vmatmul.f32.gmra.mxu0 %v2085
        %v2107 = vpop.f32.mrf.mxu0
        %v2108 = vadd.f32 0.0, %v2107
        %2109 = vmatmul.f32.gmra.mxu0 %v2088
        %v2110 = vpop.f32.mrf.mxu0
        %v2111 = vadd.f32 0.0, %v2110
        %2112 = vdwg.mxu0
        %2113 = vrot.lane.b32.xlu0 %v677, 48
        %v2114 = vpop.permute.xlu0 %2113
        %2115 = vrot.lane.b32.xlu0 %v680, 48
        %v2116 = vpop.permute.xlu0 %2115
        %v2120 = vsel %vm839, %v1992, 0
        %v2123 = vsel %vm839, %v2007, 0
        %2125 = vmatpush.msra.mxu0 0.0
        %2126 = vmatpush.msra.mxu0 0.0
        %2127 = vmatpush.msra.mxu0 0.0
        %2128 = vmatpush.msra.mxu0 0.0
        %2129 = vmatpush.msra.mxu0 0.0
        %2130 = vmatpush.msra.mxu0 0.0
        %2131 = vmatpush.msra.mxu0 0.0
        %2132 = vmatpush.msra.mxu0 0.0
        %2133 = vmatpush.msra.mxu0 0.0
        %2134 = vmatpush.msra.mxu0 0.0
        %2135 = vmatpush.msra.mxu0 0.0
        %2136 = vmatpush.msra.mxu0 0.0
        %2137 = vmatpush.msra.mxu0 0.0
        %2138 = vmatpush.msra.mxu0 0.0
        %2139 = vmatpush.msra.mxu0 %v2116
        %2140 = vmatpush.msra.mxu0 %v2114
        %2141 = vmatmul.f32.gmra.mxu0 %v2120
        %v2142 = vpop.f32.mrf.mxu0
        %v2143 = vadd.f32 0.0, %v2142
        %2144 = vmatmul.f32.gmra.mxu0 %v2123
        %v2145 = vpop.f32.mrf.mxu0
        %v2146 = vadd.f32 0.0, %v2145
        %2147 = vdwg.mxu0
        %2148 = vrot.lane.b32.xlu0 %v659, 104
        %v2149 = vpop.permute.xlu0 %2148
        %2150 = vrot.lane.b32.xlu0 %v662, 104
        %v2151 = vpop.permute.xlu0 %2150
        %2152 = vrot.lane.b32.xlu0 %v659, 72
        %v2153 = vpop.permute.xlu0 %2152
        %2154 = vrot.lane.b32.xlu0 %v662, 72
        %v2155 = vpop.permute.xlu0 %2154
        %v2156 = vsel %vm696, %v2149, 0
        %v2158 = vsel %vm696, %v2151, 0
        %v2160 = vsel %vm696, %v2153, 0
        %v2162 = vsel %vm696, %v2155, 0
        %2164 = vmatpush.xpose.msra.mxu0 0.0
        %2165 = vmatpush.xpose.msra.mxu0 0.0
        %2166 = vmatpush.xpose.msra.mxu0 0.0
        %2167 = vmatpush.xpose.msra.mxu0 0.0
        %2168 = vmatpush.xpose.msra.mxu0 0.0
        %2169 = vmatpush.xpose.msra.mxu0 0.0
        %2170 = vmatpush.xpose.msra.mxu0 0.0
        %2171 = vmatpush.xpose.msra.mxu0 0.0
        %2172 = vmatpush.xpose.msra.mxu0 0.0
        %2173 = vmatpush.xpose.msra.mxu0 0.0
        %2174 = vmatpush.xpose.msra.mxu0 0.0
        %2175 = vmatpush.xpose.msra.mxu0 0.0
        %2176 = vmatpush.xpose.msra.mxu0 0.0
        %2177 = vmatpush.xpose.msra.mxu0 0.0
        %2178 = vmatpush.xpose.msra.mxu0 %v2162
        %2179 = vmatpush.xpose.msra.mxu0 %v2160
        %2180 = vmatmul.f32.gmra.mxu0 %v2156
        %v2181 = vpop.f32.mrf.mxu0
        %v2182 = vadd.f32 %v688, %v2181
        %2183 = vmatmul.f32.gmra.mxu0 %v2158
        %v2184 = vpop.f32.mrf.mxu0
        %v2185 = vadd.f32 %v689, %v2184
        %2186 = vdwg.mxu0
        %2187 = vrot.lane.b32.xlu0 %v665, 104
        %v2188 = vpop.permute.xlu0 %2187
        %2189 = vrot.lane.b32.xlu0 %v668, 104
        %v2190 = vpop.permute.xlu0 %2189
        %2191 = vrot.lane.b32.xlu0 %v665, 72
        %v2192 = vpop.permute.xlu0 %2191
        %2193 = vrot.lane.b32.xlu0 %v668, 72
        %v2194 = vpop.permute.xlu0 %2193
        %v2195 = vsel %vm696, %v2188, 0
        %v2197 = vsel %vm696, %v2190, 0
        %v2199 = vsel %vm696, %v2192, 0
        %v2201 = vsel %vm696, %v2194, 0
        %2203 = vmatpush.xpose.msra.mxu0 0.0
        %2204 = vmatpush.xpose.msra.mxu0 0.0
        %2205 = vmatpush.xpose.msra.mxu0 0.0
        %2206 = vmatpush.xpose.msra.mxu0 0.0
        %2207 = vmatpush.xpose.msra.mxu0 0.0
        %2208 = vmatpush.xpose.msra.mxu0 0.0
        %2209 = vmatpush.xpose.msra.mxu0 0.0
        %2210 = vmatpush.xpose.msra.mxu0 0.0
        %2211 = vmatpush.xpose.msra.mxu0 0.0
        %2212 = vmatpush.xpose.msra.mxu0 0.0
        %2213 = vmatpush.xpose.msra.mxu0 0.0
        %2214 = vmatpush.xpose.msra.mxu0 0.0
        %2215 = vmatpush.xpose.msra.mxu0 0.0
        %2216 = vmatpush.xpose.msra.mxu0 0.0
        %2217 = vmatpush.xpose.msra.mxu0 %v2201
        %2218 = vmatpush.xpose.msra.mxu0 %v2199
        %2219 = vmatmul.f32.gmra.mxu0 %v2195
        %v2220 = vpop.f32.mrf.mxu0
        %v2221 = vadd.f32 %v688, %v2220
        %2222 = vmatmul.f32.gmra.mxu0 %v2197
        %v2223 = vpop.f32.mrf.mxu0
        %v2224 = vadd.f32 %v689, %v2223
        %2225 = vdwg.mxu0
        %2226 = vrot.lane.b32.xlu0 %v671, 104
        %v2227 = vpop.permute.xlu0 %2226
        %2228 = vrot.lane.b32.xlu0 %v674, 104
        %v2229 = vpop.permute.xlu0 %2228
        %2230 = vrot.lane.b32.xlu0 %v671, 72
        %v2231 = vpop.permute.xlu0 %2230
        %2232 = vrot.lane.b32.xlu0 %v674, 72
        %v2233 = vpop.permute.xlu0 %2232
        %v2234 = vsel %vm696, %v2227, 0
        %v2236 = vsel %vm696, %v2229, 0
        %v2238 = vsel %vm696, %v2231, 0
        %v2240 = vsel %vm696, %v2233, 0
        %2242 = vmatpush.xpose.msra.mxu0 0.0
        %2243 = vmatpush.xpose.msra.mxu0 0.0
        %2244 = vmatpush.xpose.msra.mxu0 0.0
        %2245 = vmatpush.xpose.msra.mxu0 0.0
        %2246 = vmatpush.xpose.msra.mxu0 0.0
        %2247 = vmatpush.xpose.msra.mxu0 0.0
        %2248 = vmatpush.xpose.msra.mxu0 0.0
        %2249 = vmatpush.xpose.msra.mxu0 0.0
        %2250 = vmatpush.xpose.msra.mxu0 0.0
        %2251 = vmatpush.xpose.msra.mxu0 0.0
        %2252 = vmatpush.xpose.msra.mxu0 0.0
        %2253 = vmatpush.xpose.msra.mxu0 0.0
        %2254 = vmatpush.xpose.msra.mxu0 0.0
        %2255 = vmatpush.xpose.msra.mxu0 0.0
        %2256 = vmatpush.xpose.msra.mxu0 %v2240
        %2257 = vmatpush.xpose.msra.mxu0 %v2238
        %2258 = vmatmul.f32.gmra.mxu0 %v2234
        %v2259 = vpop.f32.mrf.mxu0
        %v2260 = vadd.f32 %v688, %v2259
        %2261 = vmatmul.f32.gmra.mxu0 %v2236
        %v2262 = vpop.f32.mrf.mxu0
        %v2263 = vadd.f32 %v689, %v2262
        %2264 = vdwg.mxu0
        %2265 = vrot.lane.b32.xlu0 %v677, 104
        %v2266 = vpop.permute.xlu0 %2265
        %2267 = vrot.lane.b32.xlu0 %v680, 104
        %v2268 = vpop.permute.xlu0 %2267
        %2269 = vrot.lane.b32.xlu0 %v677, 72
        %v2270 = vpop.permute.xlu0 %2269
        %2271 = vrot.lane.b32.xlu0 %v680, 72
        %v2272 = vpop.permute.xlu0 %2271
        %v2273 = vsel %vm696, %v2266, 0
        %v2275 = vsel %vm696, %v2268, 0
        %v2277 = vsel %vm696, %v2270, 0
        %v2279 = vsel %vm696, %v2272, 0
        %2281 = vmatpush.xpose.msra.mxu0 0.0
        %2282 = vmatpush.xpose.msra.mxu0 0.0
        %2283 = vmatpush.xpose.msra.mxu0 0.0
        %2284 = vmatpush.xpose.msra.mxu0 0.0
        %2285 = vmatpush.xpose.msra.mxu0 0.0
        %2286 = vmatpush.xpose.msra.mxu0 0.0
        %2287 = vmatpush.xpose.msra.mxu0 0.0
        %2288 = vmatpush.xpose.msra.mxu0 0.0
        %2289 = vmatpush.xpose.msra.mxu0 0.0
        %2290 = vmatpush.xpose.msra.mxu0 0.0
        %2291 = vmatpush.xpose.msra.mxu0 0.0
        %2292 = vmatpush.xpose.msra.mxu0 0.0
        %2293 = vmatpush.xpose.msra.mxu0 0.0
        %2294 = vmatpush.xpose.msra.mxu0 0.0
        %2295 = vmatpush.xpose.msra.mxu0 %v2279
        %2296 = vmatpush.xpose.msra.mxu0 %v2277
        %2297 = vmatmul.f32.gmra.mxu0 %v2273
        %v2298 = vpop.f32.mrf.mxu0
        %v2299 = vadd.f32 %v688, %v2298
        %2300 = vmatmul.f32.gmra.mxu0 %v2275
        %v2301 = vpop.f32.mrf.mxu0
        %v2302 = vadd.f32 %v689, %v2301
        %2303 = vdwg.mxu0
        %v2304 = vsel %vm839, %v2182, -inf
        %2305 = vmax.xlane.f32.xlu0 %v2304
        %v2306 = vpop.xlane.xlu0 %2305
        %v2307 = vsel %vm839, %v2185, -inf
        %2308 = vmax.xlane.f32.xlu0 %v2307
        %v2309 = vpop.xlane.xlu0 %2308
        %v2310 = vsel %vm839, %v2221, -inf
        %2311 = vmax.xlane.f32.xlu0 %v2310
        %v2312 = vpop.xlane.xlu0 %2311
        %v2313 = vsel %vm839, %v2224, -inf
        %2314 = vmax.xlane.f32.xlu0 %v2313
        %v2315 = vpop.xlane.xlu0 %2314
        %v2316 = vsel %vm839, %v2260, -inf
        %2317 = vmax.xlane.f32.xlu0 %v2316
        %v2318 = vpop.xlane.xlu0 %2317
        %v2319 = vsel %vm839, %v2263, -inf
        %2320 = vmax.xlane.f32.xlu0 %v2319
        %v2321 = vpop.xlane.xlu0 %2320
        %v2322 = vsel %vm839, %v2299, -inf
        %2323 = vmax.xlane.f32.xlu0 %v2322
        %v2324 = vpop.xlane.xlu0 %2323
        %v2325 = vsel %vm839, %v2302, -inf
        %2326 = vmax.xlane.f32.xlu0 %v2325
        %v2327 = vpop.xlane.xlu0 %2326
        %v2328 = vsub.f32 %v2182, %v2306
        %v2329 = vsub.f32 %v2185, %v2309
        %v2330 = vsub.f32 %v2221, %v2312
        %v2331 = vsub.f32 %v2224, %v2315
        %v2332 = vsub.f32 %v2260, %v2318
        %v2333 = vsub.f32 %v2263, %v2321
        %v2334 = vsub.f32 %v2299, %v2324
        %v2335 = vsub.f32 %v2302, %v2327
        %v2336 = vmul.f32 %v2328, 1.442695
        %v2337 = vpow.pop %v2336
        %v2338 = vmul.f32 %v2329, 1.442695
        %v2339 = vpow.pop %v2338
        %v2340 = vmul.f32 %v2330, 1.442695
        %v2341 = vpow.pop %v2340
        %v2342 = vmul.f32 %v2331, 1.442695
        %v2343 = vpow.pop %v2342
        %v2344 = vmul.f32 %v2332, 1.442695
        %v2345 = vpow.pop %v2344
        %v2346 = vmul.f32 %v2333, 1.442695
        %v2347 = vpow.pop %v2346
        %v2348 = vmul.f32 %v2334, 1.442695
        %v2349 = vpow.pop %v2348
        %v2350 = vmul.f32 %v2335, 1.442695
        %v2351 = vpow.pop %v2350
        %v2352 = vsel %vm839, %v2337, 0.0
        %2353 = vadd.xlane.f32.xlu0 %v2352
        %v2354 = vpop.xlane.xlu0 %2353
        %v2355 = vsel %vm839, %v2339, 0.0
        %2356 = vadd.xlane.f32.xlu0 %v2355
        %v2357 = vpop.xlane.xlu0 %2356
        %v2358 = vsel %vm839, %v2341, 0.0
        %2359 = vadd.xlane.f32.xlu0 %v2358
        %v2360 = vpop.xlane.xlu0 %2359
        %v2361 = vsel %vm839, %v2343, 0.0
        %2362 = vadd.xlane.f32.xlu0 %v2361
        %v2363 = vpop.xlane.xlu0 %2362
        %v2364 = vsel %vm839, %v2345, 0.0
        %2365 = vadd.xlane.f32.xlu0 %v2364
        %v2366 = vpop.xlane.xlu0 %2365
        %v2367 = vsel %vm839, %v2347, 0.0
        %2368 = vadd.xlane.f32.xlu0 %v2367
        %v2369 = vpop.xlane.xlu0 %2368
        %v2370 = vsel %vm839, %v2349, 0.0
        %2371 = vadd.xlane.f32.xlu0 %v2370
        %v2372 = vpop.xlane.xlu0 %2371
        %v2373 = vsel %vm839, %v2351, 0.0
        %2374 = vadd.xlane.f32.xlu0 %v2373
        %v2375 = vpop.xlane.xlu0 %2374
        %v2376 = vrcp.pop %v2354
        %v2377 = vmul.f32 %v2354, %v2376
        %v2378 = vsub.f32 1.0, %v2377
        %v2379 = vmul.f32 %v2376, %v2378
        %v2380 = vadd.f32 %v2376, %v2379
        %vm2381 = vweird.f32 %v2354
        %vm2382 = vweird.f32 %v2376
        %vm2383 = vmor %vm2381, %vm2382
        %v2384 = vsel %vm2383, %v2376, %v2380
        %v2385 = vand.u32 2147483647, %v2354
        %vm2386 = vcmp.eq.f32.partialorder %v2385, 8.507059e+37
        %v2387 = vand.u32 %v2354, 2147483648
        %v2388 = vor.u32 1.1754944e-38, %v2387
        %v2389 = vsel %vm2386, %v2388, %v2384
        %v2390 = vmul.f32 %v2337, %v2389
        %v2391 = vrcp.pop %v2357
        %v2392 = vmul.f32 %v2357, %v2391
        %v2393 = vsub.f32 1.0, %v2392
        %v2394 = vmul.f32 %v2391, %v2393
        %v2395 = vadd.f32 %v2391, %v2394
        %vm2396 = vweird.f32 %v2357
        %vm2397 = vweird.f32 %v2391
        %vm2398 = vmor %vm2396, %vm2397
        %v2399 = vsel %vm2398, %v2391, %v2395
        %v2400 = vand.u32 2147483647, %v2357
        %vm2401 = vcmp.eq.f32.partialorder %v2400, 8.507059e+37
        %v2402 = vand.u32 %v2357, 2147483648
        %v2403 = vor.u32 1.1754944e-38, %v2402
        %v2404 = vsel %vm2401, %v2403, %v2399
        %v2405 = vmul.f32 %v2339, %v2404
        %v2406 = vrcp.pop %v2360
        %v2407 = vmul.f32 %v2360, %v2406
        %v2408 = vsub.f32 1.0, %v2407
        %v2409 = vmul.f32 %v2406, %v2408
        %v2410 = vadd.f32 %v2406, %v2409
        %vm2411 = vweird.f32 %v2360
        %vm2412 = vweird.f32 %v2406
        %vm2413 = vmor %vm2411, %vm2412
        %v2414 = vsel %vm2413, %v2406, %v2410
        %v2415 = vand.u32 2147483647, %v2360
        %vm2416 = vcmp.eq.f32.partialorder %v2415, 8.507059e+37
        %v2417 = vand.u32 %v2360, 2147483648
        %v2418 = vor.u32 1.1754944e-38, %v2417
        %v2419 = vsel %vm2416, %v2418, %v2414
        %v2420 = vmul.f32 %v2341, %v2419
        %v2421 = vrcp.pop %v2363
        %v2422 = vmul.f32 %v2363, %v2421
        %v2423 = vsub.f32 1.0, %v2422
        %v2424 = vmul.f32 %v2421, %v2423
        %v2425 = vadd.f32 %v2421, %v2424
        %vm2426 = vweird.f32 %v2363
        %vm2427 = vweird.f32 %v2421
        %vm2428 = vmor %vm2426, %vm2427
        %v2429 = vsel %vm2428, %v2421, %v2425
        %v2430 = vand.u32 2147483647, %v2363
        %vm2431 = vcmp.eq.f32.partialorder %v2430, 8.507059e+37
        %v2432 = vand.u32 %v2363, 2147483648
        %v2433 = vor.u32 1.1754944e-38, %v2432
        %v2434 = vsel %vm2431, %v2433, %v2429
        %v2435 = vmul.f32 %v2343, %v2434
        %v2436 = vrcp.pop %v2366
        %v2437 = vmul.f32 %v2366, %v2436
        %v2438 = vsub.f32 1.0, %v2437
        %v2439 = vmul.f32 %v2436, %v2438
        %v2440 = vadd.f32 %v2436, %v2439
        %vm2441 = vweird.f32 %v2366
        %vm2442 = vweird.f32 %v2436
        %vm2443 = vmor %vm2441, %vm2442
        %v2444 = vsel %vm2443, %v2436, %v2440
        %v2445 = vand.u32 2147483647, %v2366
        %vm2446 = vcmp.eq.f32.partialorder %v2445, 8.507059e+37
        %v2447 = vand.u32 %v2366, 2147483648
        %v2448 = vor.u32 1.1754944e-38, %v2447
        %v2449 = vsel %vm2446, %v2448, %v2444
        %v2450 = vmul.f32 %v2345, %v2449
        %v2451 = vrcp.pop %v2369
        %v2452 = vmul.f32 %v2369, %v2451
        %v2453 = vsub.f32 1.0, %v2452
        %v2454 = vmul.f32 %v2451, %v2453
        %v2455 = vadd.f32 %v2451, %v2454
        %vm2456 = vweird.f32 %v2369
        %vm2457 = vweird.f32 %v2451
        %vm2458 = vmor %vm2456, %vm2457
        %v2459 = vsel %vm2458, %v2451, %v2455
        %v2460 = vand.u32 2147483647, %v2369
        %vm2461 = vcmp.eq.f32.partialorder %v2460, 8.507059e+37
        %v2462 = vand.u32 %v2369, 2147483648
        %v2463 = vor.u32 1.1754944e-38, %v2462
        %v2464 = vsel %vm2461, %v2463, %v2459
        %v2465 = vmul.f32 %v2347, %v2464
        %v2466 = vrcp.pop %v2372
        %v2467 = vmul.f32 %v2372, %v2466
        %v2468 = vsub.f32 1.0, %v2467
        %v2469 = vmul.f32 %v2466, %v2468
        %v2470 = vadd.f32 %v2466, %v2469
        %vm2471 = vweird.f32 %v2372
        %vm2472 = vweird.f32 %v2466
        %vm2473 = vmor %vm2471, %vm2472
        %v2474 = vsel %vm2473, %v2466, %v2470
        %v2475 = vand.u32 2147483647, %v2372
        %vm2476 = vcmp.eq.f32.partialorder %v2475, 8.507059e+37
        %v2477 = vand.u32 %v2372, 2147483648
        %v2478 = vor.u32 1.1754944e-38, %v2477
        %v2479 = vsel %vm2476, %v2478, %v2474
        %v2480 = vmul.f32 %v2349, %v2479
        %v2481 = vrcp.pop %v2375
        %v2482 = vmul.f32 %v2375, %v2481
        %v2483 = vsub.f32 1.0, %v2482
        %v2484 = vmul.f32 %v2481, %v2483
        %v2485 = vadd.f32 %v2481, %v2484
        %vm2486 = vweird.f32 %v2375
        %vm2487 = vweird.f32 %v2481
        %vm2488 = vmor %vm2486, %vm2487
        %v2489 = vsel %vm2488, %v2481, %v2485
        %v2490 = vand.u32 2147483647, %v2375
        %vm2491 = vcmp.eq.f32.partialorder %v2490, 8.507059e+37
        %v2492 = vand.u32 %v2375, 2147483648
        %v2493 = vor.u32 1.1754944e-38, %v2492
        %v2494 = vsel %vm2491, %v2493, %v2489
        %v2495 = vmul.f32 %v2351, %v2494
        %2496 = vrot.lane.b32.xlu0 %v659, 40
        %v2497 = vpop.permute.xlu0 %2496
        %2498 = vrot.lane.b32.xlu0 %v662, 40
        %v2499 = vpop.permute.xlu0 %2498
        %v2503 = vsel %vm839, %v2390, 0
        %v2506 = vsel %vm839, %v2405, 0
        %2508 = vmatpush.msra.mxu0 0.0
        %2509 = vmatpush.msra.mxu0 0.0
        %2510 = vmatpush.msra.mxu0 0.0
        %2511 = vmatpush.msra.mxu0 0.0
        %2512 = vmatpush.msra.mxu0 0.0
        %2513 = vmatpush.msra.mxu0 0.0
        %2514 = vmatpush.msra.mxu0 0.0
        %2515 = vmatpush.msra.mxu0 0.0
        %2516 = vmatpush.msra.mxu0 0.0
        %2517 = vmatpush.msra.mxu0 0.0
        %2518 = vmatpush.msra.mxu0 0.0
        %2519 = vmatpush.msra.mxu0 0.0
        %2520 = vmatpush.msra.mxu0 0.0
        %2521 = vmatpush.msra.mxu0 0.0
        %2522 = vmatpush.msra.mxu0 %v2499
        %2523 = vmatpush.msra.mxu0 %v2497
        %2524 = vmatmul.f32.gmra.mxu0 %v2503
        %v2525 = vpop.f32.mrf.mxu0
        %v2526 = vadd.f32 0.0, %v2525
        %2527 = vmatmul.f32.gmra.mxu0 %v2506
        %v2528 = vpop.f32.mrf.mxu0
        %v2529 = vadd.f32 0.0, %v2528
        %2530 = vdwg.mxu0
        %2531 = vrot.lane.b32.xlu0 %v665, 40
        %v2532 = vpop.permute.xlu0 %2531
        %2533 = vrot.lane.b32.xlu0 %v668, 40
        %v2534 = vpop.permute.xlu0 %2533
        %v2538 = vsel %vm839, %v2420, 0
        %v2541 = vsel %vm839, %v2435, 0
        %2543 = vmatpush.msra.mxu0 0.0
        %2544 = vmatpush.msra.mxu0 0.0
        %2545 = vmatpush.msra.mxu0 0.0
        %2546 = vmatpush.msra.mxu0 0.0
        %2547 = vmatpush.msra.mxu0 0.0
        %2548 = vmatpush.msra.mxu0 0.0
        %2549 = vmatpush.msra.mxu0 0.0
        %2550 = vmatpush.msra.mxu0 0.0
        %2551 = vmatpush.msra.mxu0 0.0
        %2552 = vmatpush.msra.mxu0 0.0
        %2553 = vmatpush.msra.mxu0 0.0
        %2554 = vmatpush.msra.mxu0 0.0
        %2555 = vmatpush.msra.mxu0 0.0
        %2556 = vmatpush.msra.mxu0 0.0
        %2557 = vmatpush.msra.mxu0 %v2534
        %2558 = vmatpush.msra.mxu0 %v2532
        %2559 = vmatmul.f32.gmra.mxu0 %v2538
        %v2560 = vpop.f32.mrf.mxu0
        %v2561 = vadd.f32 0.0, %v2560
        %2562 = vmatmul.f32.gmra.mxu0 %v2541
        %v2563 = vpop.f32.mrf.mxu0
        %v2564 = vadd.f32 0.0, %v2563
        %2565 = vdwg.mxu0
        %2566 = vrot.lane.b32.xlu0 %v671, 40
        %v2567 = vpop.permute.xlu0 %2566
        %2568 = vrot.lane.b32.xlu0 %v674, 40
        %v2569 = vpop.permute.xlu0 %2568
        %v2573 = vsel %vm839, %v2450, 0
        %v2576 = vsel %vm839, %v2465, 0
        %2578 = vmatpush.msra.mxu0 0.0
        %2579 = vmatpush.msra.mxu0 0.0
        %2580 = vmatpush.msra.mxu0 0.0
        %2581 = vmatpush.msra.mxu0 0.0
        %2582 = vmatpush.msra.mxu0 0.0
        %2583 = vmatpush.msra.mxu0 0.0
        %2584 = vmatpush.msra.mxu0 0.0
        %2585 = vmatpush.msra.mxu0 0.0
        %2586 = vmatpush.msra.mxu0 0.0
        %2587 = vmatpush.msra.mxu0 0.0
        %2588 = vmatpush.msra.mxu0 0.0
        %2589 = vmatpush.msra.mxu0 0.0
        %2590 = vmatpush.msra.mxu0 0.0
        %2591 = vmatpush.msra.mxu0 0.0
        %2592 = vmatpush.msra.mxu0 %v2569
        %2593 = vmatpush.msra.mxu0 %v2567
        %2594 = vmatmul.f32.gmra.mxu0 %v2573
        %v2595 = vpop.f32.mrf.mxu0
        %v2596 = vadd.f32 0.0, %v2595
        %2597 = vmatmul.f32.gmra.mxu0 %v2576
        %v2598 = vpop.f32.mrf.mxu0
        %v2599 = vadd.f32 0.0, %v2598
        %2600 = vdwg.mxu0
        %2601 = vrot.lane.b32.xlu0 %v677, 40
        %v2602 = vpop.permute.xlu0 %2601
        %2603 = vrot.lane.b32.xlu0 %v680, 40
        %v2604 = vpop.permute.xlu0 %2603
        %v2608 = vsel %vm839, %v2480, 0
        %v2611 = vsel %vm839, %v2495, 0
        %2613 = vmatpush.msra.mxu0 0.0
        %2614 = vmatpush.msra.mxu0 0.0
        %2615 = vmatpush.msra.mxu0 0.0
        %2616 = vmatpush.msra.mxu0 0.0
        %2617 = vmatpush.msra.mxu0 0.0
        %2618 = vmatpush.msra.mxu0 0.0
        %2619 = vmatpush.msra.mxu0 0.0
        %2620 = vmatpush.msra.mxu0 0.0
        %2621 = vmatpush.msra.mxu0 0.0
        %2622 = vmatpush.msra.mxu0 0.0
        %2623 = vmatpush.msra.mxu0 0.0
        %2624 = vmatpush.msra.mxu0 0.0
        %2625 = vmatpush.msra.mxu0 0.0
        %2626 = vmatpush.msra.mxu0 0.0
        %2627 = vmatpush.msra.mxu0 %v2604
        %2628 = vmatpush.msra.mxu0 %v2602
        %2629 = vmatmul.f32.gmra.mxu0 %v2608
        %v2630 = vpop.f32.mrf.mxu0
        %v2631 = vadd.f32 0.0, %v2630
        %2632 = vmatmul.f32.gmra.mxu0 %v2611
        %v2633 = vpop.f32.mrf.mxu0
        %v2634 = vadd.f32 0.0, %v2633
        %2635 = vdwg.mxu0
        %2644 = vrot.lane.b32.xlu0 %v1550, 8
        %v2645 = vpop.permute.xlu0 %2644
        %2646 = vrot.lane.b32.xlu0 %v1553, 8
        %v2647 = vpop.permute.xlu0 %2646
        %2648 = vrot.lane.b32.xlu0 %v1585, 8
        %v2649 = vpop.permute.xlu0 %2648
        %2650 = vrot.lane.b32.xlu0 %v1588, 8
        %v2651 = vpop.permute.xlu0 %2650
        %2652 = vrot.lane.b32.xlu0 %v1620, 8
        %v2653 = vpop.permute.xlu0 %2652
        %2654 = vrot.lane.b32.xlu0 %v1623, 8
        %v2655 = vpop.permute.xlu0 %2654
        %2656 = vrot.lane.b32.xlu0 %v1655, 8
        %v2657 = vpop.permute.xlu0 %2656
        %2658 = vrot.lane.b32.xlu0 %v1658, 8
        %v2659 = vpop.permute.xlu0 %2658
        %2676 = vrot.lane.b32.xlu0 %v2038, 16
        %v2677 = vpop.permute.xlu0 %2676
        %2678 = vrot.lane.b32.xlu0 %v2041, 16
        %v2679 = vpop.permute.xlu0 %2678
        %2680 = vrot.lane.b32.xlu0 %v2073, 16
        %v2681 = vpop.permute.xlu0 %2680
        %2682 = vrot.lane.b32.xlu0 %v2076, 16
        %v2683 = vpop.permute.xlu0 %2682
        %2684 = vrot.lane.b32.xlu0 %v2108, 16
        %v2685 = vpop.permute.xlu0 %2684
        %2686 = vrot.lane.b32.xlu0 %v2111, 16
        %v2687 = vpop.permute.xlu0 %2686
        %2688 = vrot.lane.b32.xlu0 %v2143, 16
        %v2689 = vpop.permute.xlu0 %2688
        %2690 = vrot.lane.b32.xlu0 %v2146, 16
        %v2691 = vpop.permute.xlu0 %2690
        %2708 = vrot.lane.b32.xlu0 %v2526, 24
        %v2709 = vpop.permute.xlu0 %2708
        %2710 = vrot.lane.b32.xlu0 %v2529, 24
        %v2711 = vpop.permute.xlu0 %2710
        %2712 = vrot.lane.b32.xlu0 %v2561, 24
        %v2713 = vpop.permute.xlu0 %2712
        %2714 = vrot.lane.b32.xlu0 %v2564, 24
        %v2715 = vpop.permute.xlu0 %2714
        %2716 = vrot.lane.b32.xlu0 %v2596, 24
        %v2717 = vpop.permute.xlu0 %2716
        %2718 = vrot.lane.b32.xlu0 %v2599, 24
        %v2719 = vpop.permute.xlu0 %2718
        %2720 = vrot.lane.b32.xlu0 %v2631, 24
        %v2721 = vpop.permute.xlu0 %2720
        %2722 = vrot.lane.b32.xlu0 %v2634, 24
        %v2723 = vpop.permute.xlu0 %2722
        %v2732 = vsel %vm696, %v1062, %v2645
        %v2733 = vsel %vm696, %v1065, %v2647
        %v2734 = vsel %vm696, %v1097, %v2649
        %v2735 = vsel %vm696, %v1100, %v2651
        %v2736 = vsel %vm696, %v1132, %v2653
        %v2737 = vsel %vm696, %v1135, %v2655
        %v2738 = vsel %vm696, %v1167, %v2657
        %v2739 = vsel %vm696, %v1170, %v2659
        %v2740 = vsel %vm839, %v2732, %v2677
        %v2741 = vsel %vm839, %v2733, %v2679
        %v2742 = vsel %vm839, %v2734, %v2681
        %v2743 = vsel %vm839, %v2735, %v2683
        %v2744 = vsel %vm839, %v2736, %v2685
        %v2745 = vsel %vm839, %v2737, %v2687
        %v2746 = vsel %vm839, %v2738, %v2689
        %v2747 = vsel %vm839, %v2739, %v2691
        %vm2748 = vcmask 195584
        %v2749 = vsel %vm2748, %v2740, %v2709
        %v2750 = vsel %vm2748, %v2741, %v2711
        %v2751 = vsel %vm2748, %v2742, %v2713
        %v2752 = vsel %vm2748, %v2743, %v2715
        %v2753 = vsel %vm2748, %v2744, %v2717
        %v2754 = vsel %vm2748, %v2745, %v2719
        %v2755 = vsel %vm2748, %v2746, %v2721
        %v2756 = vsel %vm2748, %v2747, %v2723
        %v2757 = vld [vmem:[#allocation8] sm:$0xff]
        %v2758 = vld [vmem:[#allocation8 + $0x8] sm:$0xff]
        %v2759 = vld [vmem:[#allocation8 + $0x10] sm:$0xff]
        %v2760 = vld [vmem:[#allocation8 + $0x18] sm:$0xff]
        %v2761 = vld [vmem:[%s6] sm:$0x1]
        %v2763 = vperm.slane %v2761, 0
        %v2766 = vsel %vm403, %v2749, 0
        %v2769 = vsel %vm403, %v2750, 0
        %v2772 = vsel %vm403, %v2751, 0
        %v2775 = vsel %vm403, %v2752, 0
        %v2778 = vsel %vm403, %v2753, 0
        %v2781 = vsel %vm403, %v2754, 0
        %v2784 = vsel %vm403, %v2755, 0
        %v2787 = vsel %vm403, %v2756, 0
        %2789 = vmatpush.msra.mxu0 0.0
        %2790 = vmatpush.msra.mxu0 0.0
        %2791 = vmatpush.msra.mxu0 0.0
        %2792 = vmatpush.msra.mxu0 0.0
        %2793 = vmatpush.msra.mxu0 0.0
        %2794 = vmatpush.msra.mxu0 0.0
        %2795 = vmatpush.msra.mxu0 0.0
        %2796 = vmatpush.msra.mxu0 0.0
        %2797 = vmatpush.msra.mxu0 0.0
        %2798 = vmatpush.msra.mxu0 0.0
        %2799 = vmatpush.msra.mxu0 0.0
        %2800 = vmatpush.msra.mxu0 0.0
        %2801 = vmatpush.msra.mxu0 %v2760
        %2802 = vmatpush.msra.mxu0 %v2759
        %2803 = vmatpush.msra.mxu0 %v2758
        %2804 = vmatpush.msra.mxu0 %v2757
        %2805 = vmatmul.f32.gmra.mxu0 %v2766
        %v2806 = vpop.f32.mrf.mxu0
        %v2807 = vadd.f32 %v2763, %v2806
        %2808 = vmatmul.f32.gmra.mxu0 %v2769
        %v2809 = vpop.f32.mrf.mxu0
        %v2810 = vadd.f32 %v2763, %v2809
        %2811 = vmatmul.f32.gmra.mxu0 %v2772
        %v2812 = vpop.f32.mrf.mxu0
        %v2813 = vadd.f32 %v2763, %v2812
        %2814 = vmatmul.f32.gmra.mxu0 %v2775
        %v2815 = vpop.f32.mrf.mxu0
        %v2816 = vadd.f32 %v2763, %v2815
        %2817 = vmatmul.f32.gmra.mxu0 %v2778
        %v2818 = vpop.f32.mrf.mxu0
        %v2819 = vadd.f32 %v2763, %v2818
        %2820 = vmatmul.f32.gmra.mxu0 %v2781
        %v2821 = vpop.f32.mrf.mxu0
        %v2822 = vadd.f32 %v2763, %v2821
        %2823 = vmatmul.f32.gmra.mxu0 %v2784
        %v2824 = vpop.f32.mrf.mxu0
        %v2825 = vadd.f32 %v2763, %v2824
        %2826 = vmatmul.f32.gmra.mxu0 %v2787
        %v2827 = vpop.f32.mrf.mxu0
        %v2828 = vadd.f32 %v2763, %v2827
        %2829 = vdwg.mxu0
        %2830 = vst.msk [vmem:[%s390] sm:$0xff] %vm403, %v2807
        %2831 = vst.msk [vmem:[%s390 + $0x8] sm:$0xff] %vm403, %v2810
        %2832 = vst.msk [vmem:[%s390 + $0x10] sm:$0xff] %vm403, %v2813
        %2833 = vst.msk [vmem:[%s390 + $0x18] sm:$0xff] %vm403, %v2816
        %2834 = vst.msk [vmem:[%s390 + $0x20] sm:$0xff] %vm403, %v2819
        %2835 = vst.msk [vmem:[%s390 + $0x28] sm:$0xff] %vm403, %v2822
        %2836 = vst.msk [vmem:[%s390 + $0x30] sm:$0xff] %vm403, %v2825
        %2837 = vst.msk [vmem:[%s390 + $0x38] sm:$0xff] %vm403, %v2828
        %s2838 = sand.u32 %s208, 1
        %s2839 = scalar_lea.sflag [#allocation4], %s2838
        %s2840 = sand.u32 %s208, 1
        %s2841 = smul.addr %s2840, 64
        %s2842 = scalar_lea.vmem [#allocation11], %s2841
        // Predicated region
        $region73: #{tpu_custom_call.1} parent=51 // pred_check
          %p2843 = pneg %p218
        $region74: #{tpu_custom_call.1} parent=51 // pred_check_branch
          %2845 = sbr.rel (%p2843) target = $region76
        $region75: #{tpu_custom_call.1} parent=51 // pred_region
          %s2846 = smul.u32 4, %s27
          %2848 = vsyncadd %s2839, 0
          %s2849 = smul.addr %s2846, 2
          %s2850 = smul.addr %s2849, 8
          %s2851 = scalar_lea.hbm %s8, %s2850
          %s2852 = sshll.u32 %s2842, 4
          %s2853 = int_to_ptr.vmem [resolvable:$true] %s2852
          %s2854 = sshll.u32 %s2851, 4
          %s2855 = int_to_ptr.hbm [resolvable:$true] %s2854
          %2860 = dma.vmem_to_hbm [thread:$0]  %s2853, 1024, %s2855, %s2839, 128, 128, 8
        $region76: #{tpu_custom_call.1} parent=51 // pred_fallthru
          _
      $region52: #{tpu_custom_call.1} parent=5 // pred_fallthru
        _
      %p2861 = scmp.le.s32.totalorder 2, %s22
      // Predicated region
      $region77: #{tpu_custom_call.1} parent=5 // pred_check
        %p2862 = pneg %p2861
      $region78: #{tpu_custom_call.1} parent=5 // pred_check_branch
        %2864 = sbr.rel (%p2862) target = $region80
      $region79: #{tpu_custom_call.1} parent=5 // pred_region
        %s2865 = ssub.s32 %s22, 2
        // Predicated region
        $region81: #{tpu_custom_call.1} parent=79 // pred_check
          %p2866 = pneg %p224
        $region82: #{tpu_custom_call.1} parent=79 // pred_check_branch
          %2868 = sbr.rel (%p2866) target = $region84
        $region83: #{tpu_custom_call.1} parent=79 // pred_region
          %s2869 = sand.u32 %s209, 1
          %s2870 = scalar_lea.sflag [#allocation4], %s2869
          %s2871 = sand.u32 %s209, 1
          %s2872 = smul.addr %s2871, 64
          %s2873 = scalar_lea.vmem [#allocation11], %s2872
          %2875 = dma.done %s2870, 1024
        $region84: #{tpu_custom_call.1} parent=79 // pred_fallthru
          _
      $region80: #{tpu_custom_call.1} parent=5 // pred_fallthru
        _
    $region6: #{tpu_custom_call.1} parent=1 // loop_footer
      %s26 = sadd.s32 1, %s22
    $region7: #{tpu_custom_call.1} parent=1 // loop_footer_branch
      %21 = sbr.rel target = $region3
    $region8: #{tpu_custom_call.1} parent=1 // loop_exit
      _
    %2876 = vsyncpa [#allocation3], 1
    %s2877 = scalar_lea.sflag [#allocation3], 1
    %2878 = vsyncpa %s2877, 1
    %2879 = vsyncpa [#allocation6], 1
    %2880 = vsyncpa [#allocation9], 1
    %2881 = vsyncpa [#allocation4], 1
    %s2882 = scalar_lea.sflag [#allocation4], 1
    %2883 = vsyncpa %s2882, 1

</llo_original>
